<compile_context>
chip_gen: v6e
topology: v6e:2x2x1
jax: 0.10.0
libtpu: 0.0.40
codegen_flags: <defaults>
</compile_context>

<pallas_src>
import functools
import math

import jax
import jax.numpy as jnp
from jax.experimental import pallas as pl
from jax.experimental.pallas import tpu as pltpu


_VMEM_SPEC = pl.BlockSpec(memory_space=pltpu.MemorySpace.VMEM)


# ---------------------------------------------------------------------------
# Fused kernel
# ---------------------------------------------------------------------------
def _make_timenet_kernel(num_layers, T, B, H):
    """Build the fused (LSTM stack + Linear) kernel for static sizes."""

    def timenet_kernel(*args):
        # args layout:
        #   x_ref                        (T*B, D)    flattened time-major input
        #   [w_ih_l, w_hh_l, b_l] * L    (D_in,4H), (H,4H), (1,4H)
        #   lin_w_ref, lin_b_ref         (H, C), (1, C)
        #   out_ref                      (T, C)
        #   seq_scr                      (T*B, H) f32  layer->layer sequence buf
        #   last_scr                     (T, H)   f32  h_t[B-1] of final layer
        x_ref = args[0]
        lin_w_ref = args[1 + 3 * num_layers]
        lin_b_ref = args[2 + 3 * num_layers]
        out_ref = args[3 + 3 * num_layers]
        seq_scr = args[4 + 3 * num_layers]
        last_scr = args[5 + 3 * num_layers]

        # Current layer input as a value, time-major flattened (T*B, D_in).
        x_cur = x_ref[...].astype(jnp.float32)

        for l in range(num_layers):
            # Hoisted weight/bias loads (read once per layer, not per step).
            w_ih = args[1 + 3 * l][...]          # (D_in, 4H)
            w_hh = args[2 + 3 * l][...]          # (H, 4H)
            b = args[3 + 3 * l][...]             # (1, 4H)

            # Hoisted input projection + bias: one big MXU matmul, completely
            # off the serial recurrence path.
            xg = jnp.dot(x_cur, w_ih,
                         preferred_element_type=jnp.float32) + b   # (T*B, 4H)

            h = jnp.zeros((B, H), jnp.float32)
            c = jnp.zeros((B, H), jnp.float32)
            last_layer = (l == num_layers - 1)

            # T is small & static -> full Python unroll; only h @ W_hh is
            # serial per step.
            for t in range(T):
                gates = xg[t * B:(t + 1) * B, :] + jnp.dot(
                    h, w_hh, preferred_element_type=jnp.float32)   # (B, 4H)

                # Full-vreg activations (4H = one lane width), slice after.
                sig = jax.nn.sigmoid(gates)
                th = jnp.tanh(gates)
                i_g = sig[:, 0:H]          # input gate
                f_g = sig[:, H:2 * H]      # forget gate
                g_g = th[:, 2 * H:3 * H]   # cell candidate
                o_g = sig[:, 3 * H:4 * H]  # output gate

                c = f_g * c + i_g * g_g
                h = o_g * jnp.tanh(c)

                if last_layer:
                    # out[:, -1, :] with batch_first=False -> keep only the
                    # last batch element's hidden state at every timestep.
                    last_scr[t:t + 1, :] = h[B - 1:B, :]
                else:
                    seq_scr[t * B:(t + 1) * B, :] = h

            if not last_layer:
                x_cur = seq_scr[...]

        # Linear head, fused into the same kernel.
        logits = jnp.dot(last_scr[...], lin_w_ref[...],
                         preferred_element_type=jnp.float32) + lin_b_ref[...]
        out_ref[...] = logits.astype(out_ref.dtype)

    return timenet_kernel


# ---------------------------------------------------------------------------
# Wrapper
# ---------------------------------------------------------------------------
def timenet_forward(batch_input, params):
    """Forward pass of timeNet.

    batch_input: (T, B, input_size)
    returns:     (T, num_classes)   -- reproduces `linear(out[:, -1, :])`
                                       with PyTorch's batch_first=False LSTM.
    """
    T, B, D = batch_input.shape
    layers = params["lstm_layers"]
    num_layers = len(layers)
    H = layers[0][1].shape[0]
    C = params["lin_w_t"].shape[1]

    # Flatten (T, B, D) -> (T*B, D) in the wrapper (free row-major reshape) so
    # the kernel works on 2-D slabs only.
    x_flat = batch_input.reshape(T * B, D)

    flat_args = [x_flat]
    for (w_ih_t, w_hh_t, b) in layers:
        flat_args += [w_ih_t, w_hh_t, b]
    flat_args += [params["lin_w_t"], params["lin_b"]]

    kernel = _make_timenet_kernel(num_layers, T, B, H)
    return pl.pallas_call(
        kernel,
        out_shape=jax.ShapeDtypeStruct((T, C), batch_input.dtype),
        in_specs=[_VMEM_SPEC] * len(flat_args),
        out_specs=_VMEM_SPEC,
        scratch_shapes=[
            pltpu.VMEM((T * B, H), jnp.float32),   # inter-layer sequence buf
            pltpu.VMEM((T, H), jnp.float32),       # last-batch-row hidden seq
        ],
    )(*flat_args)


# ---------------------------------------------------------------------------
# Deterministic parameter init (PyTorch shapes; uniform(-k, k), k = 1/sqrt(H))
# ---------------------------------------------------------------------------
def init_timenet_params(num_layers, input_size, hidden_size, num_classes, key):
    H = hidden_size
    k = 1.0 / math.sqrt(H)
    layers = []
    for l in range(num_layers):
        d_in = input_size if l == 0 else H
        key, k1, k2, k3, k4 = jax.random.split(key, 5)
        w_ih = jax.random.uniform(k1, (4 * H, d_in), jnp.float32, -k, k)
        w_hh = jax.random.uniform(k2, (4 * H, H), jnp.float32, -k, k)
        b_ih = jax.random.uniform(k3, (4 * H,), jnp.float32, -k, k)
        b_hh = jax.random.uniform(k4, (4 * H,), jnp.float32, -k, k)
        # pre-transpose weights, combine biases (b_ih + b_hh)
        layers.append((w_ih.T, w_hh.T, (b_ih + b_hh)[None, :]))
    key, k5, k6 = jax.random.split(key, 3)
    lin_w = jax.random.uniform(k5, (num_classes, H), jnp.float32, -k, k)
    lin_b = jax.random.uniform(k6, (num_classes,), jnp.float32, -k, k)
    return {
        "lstm_layers": layers,
        "lin_w_t": lin_w.T,
        "lin_b": lin_b[None, :],
    }


# ---------------------------------------------------------------------------
# Pure-JAX reference (for in-script verification)
# ---------------------------------------------------------------------------
def timenet_reference(x, params):
    T, B, _ = x.shape
    out = x.astype(jnp.float32)
    for (w_ih_t, w_hh_t, b) in params["lstm_layers"]:
        H = w_hh_t.shape[0]
        h = jnp.zeros((B, H), jnp.float32)
        c = jnp.zeros((B, H), jnp.float32)
        ys = []
        for t in range(T):
            gates = out[t] @ w_ih_t + h @ w_hh_t + b
            i = jax.nn.sigmoid(gates[:, 0:H])
            f = jax.nn.sigmoid(gates[:, H:2 * H])
            g = jnp.tanh(gates[:, 2 * H:3 * H])
            o = jax.nn.sigmoid(gates[:, 3 * H:4 * H])
            c = f * c + i * g
            h = o * jnp.tanh(c)
            ys.append(h)
        out = jnp.stack(ys, axis=0)
    last = out[:, -1, :]
    return last @ params["lin_w_t"] + params["lin_b"]


# ---------------------------------------------------------------------------
if __name__ == "__main__":
    num_layers = 2
    input_size = 4
    hidden_size = 32
    num_classes = 5
    seq_len = 8
    batch = 2

    key = jax.random.PRNGKey(0)
    key_x, key_p = jax.random.split(key)

    params = init_timenet_params(num_layers, input_size, hidden_size,
                                 num_classes, key=key_p)
    x = jax.random.normal(key_x, (seq_len, batch, input_size), jnp.float32)

    out = timenet_forward(x, params)
    out = jax.block_until_ready(out)
    assert out.shape == (seq_len, num_classes), out.shape

    ref = timenet_reference(x, params)
    max_err = float(jnp.max(jnp.abs(out - ref)))
    assert jnp.allclose(out, ref, rtol=2e-3, atol=2e-3), max_err

    print("KERNEL_OK")
</pallas_src>

<mosaic_0001>
module attributes {stable_mosaic.version = 11 : i64} {
  func.func @timenet_kernel(%arg0: memref<16x4xf32, #tpu.memory_space<vmem>>, %arg1: memref<4x128xf32, #tpu.memory_space<vmem>>, %arg2: memref<32x128xf32, #tpu.memory_space<vmem>>, %arg3: memref<1x128xf32, #tpu.memory_space<vmem>>, %arg4: memref<32x128xf32, #tpu.memory_space<vmem>>, %arg5: memref<32x128xf32, #tpu.memory_space<vmem>>, %arg6: memref<1x128xf32, #tpu.memory_space<vmem>>, %arg7: memref<32x5xf32, #tpu.memory_space<vmem>>, %arg8: memref<1x5xf32, #tpu.memory_space<vmem>>, %arg9: memref<8x5xf32, #tpu.memory_space<vmem>>, %arg10: memref<16x32xf32, #tpu.memory_space<vmem>>, %arg11: memref<8x32xf32, #tpu.memory_space<vmem>>) attributes {dimension_semantics = [], scalar_prefetch = 0 : i64, scratch_operands = 2 : i64, tpu.core_type = #tpu.core_type<tc>} {
    %c0 = arith.constant 0 : index
    %c0_0 = arith.constant 0 : index
    %0 = vector.load %arg0[%c0, %c0_0] : memref<16x4xf32, #tpu.memory_space<vmem>>, vector<16x4xf32>
    %c0_1 = arith.constant 0 : index
    %c0_2 = arith.constant 0 : index
    %1 = vector.load %arg1[%c0_1, %c0_2] : memref<4x128xf32, #tpu.memory_space<vmem>>, vector<4x128xf32>
    %c0_3 = arith.constant 0 : index
    %c0_4 = arith.constant 0 : index
    %2 = vector.load %arg2[%c0_3, %c0_4] : memref<32x128xf32, #tpu.memory_space<vmem>>, vector<32x128xf32>
    %c0_5 = arith.constant 0 : index
    %c0_6 = arith.constant 0 : index
    %3 = vector.load %arg3[%c0_5, %c0_6] : memref<1x128xf32, #tpu.memory_space<vmem>>, vector<1x128xf32>
    %cst = arith.constant dense<0.000000e+00> : vector<16x128xf32>
    %4 = tpu.matmul %0, %1, %cst {dimension_numbers = #tpu.dot_dimension_numbers<[1], [0], [0], [1], [0, 0, 1, 1], [], []>} : vector<16x4xf32>, vector<4x128xf32>, vector<16x128xf32> -> vector<16x128xf32>
    %5 = vector.broadcast %3 : vector<1x128xf32> to vector<16x128xf32>
    %6 = arith.addf %4, %5 : vector<16x128xf32>
    %cst_7 = arith.constant 0.000000e+00 : f32
    %7 = vector.broadcast %cst_7 : f32 to vector<2x32xf32>
    %cst_8 = arith.constant 0.000000e+00 : f32
    %8 = vector.broadcast %cst_8 : f32 to vector<2x32xf32>
    %9 = vector.extract_strided_slice %6 {offsets = [0, 0], sizes = [2, 128], strides = [1, 1]} : vector<16x128xf32> to vector<2x128xf32>
    %cst_9 = arith.constant dense<0.000000e+00> : vector<2x128xf32>
    %10 = tpu.matmul %7, %2, %cst_9 {dimension_numbers = #tpu.dot_dimension_numbers<[1], [0], [0], [1], [0, 0, 1, 1], [], []>} : vector<2x32xf32>, vector<32x128xf32>, vector<2x128xf32> -> vector<2x128xf32>
    %11 = arith.addf %9, %10 : vector<2x128xf32>
    %12 = arith.negf %11 : vector<2x128xf32>
    %13 = math.exp %12 : vector<2x128xf32>
    %cst_10 = arith.constant 1.000000e+00 : f32
    %14 = vector.broadcast %cst_10 : f32 to vector<2x128xf32>
    %15 = arith.addf %14, %13 : vector<2x128xf32>
    %16 = arith.divf %14, %15 : vector<2x128xf32>
    %17 = math.tanh %11 : vector<2x128xf32>
    %18 = vector.extract_strided_slice %16 {offsets = [0, 0], sizes = [2, 32], strides = [1, 1]} : vector<2x128xf32> to vector<2x32xf32>
    %19 = vector.extract_strided_slice %16 {offsets = [0, 32], sizes = [2, 32], strides = [1, 1]} : vector<2x128xf32> to vector<2x32xf32>
    %20 = vector.extract_strided_slice %17 {offsets = [0, 64], sizes = [2, 32], strides = [1, 1]} : vector<2x128xf32> to vector<2x32xf32>
    %21 = vector.extract_strided_slice %16 {offsets = [0, 96], sizes = [2, 32], strides = [1, 1]} : vector<2x128xf32> to vector<2x32xf32>
    %22 = arith.mulf %19, %8 : vector<2x32xf32>
    %23 = arith.mulf %18, %20 : vector<2x32xf32>
    %24 = arith.addf %22, %23 : vector<2x32xf32>
    %25 = math.tanh %24 : vector<2x32xf32>
    %26 = arith.mulf %21, %25 : vector<2x32xf32>
    %c0_11 = arith.constant 0 : index
    %c0_12 = arith.constant 0 : index
    %27 = vector.load %arg10[%c0_11, %c0_12] : memref<16x32xf32, #tpu.memory_space<vmem>>, vector<2x32xf32>
    tpu.vector_store %arg10[%c0_11, %c0_12], %26 {strides = array<i32>} : memref<16x32xf32, #tpu.memory_space<vmem>>, vector<2x32xf32>,
    %28 = vector.extract_strided_slice %6 {offsets = [2, 0], sizes = [2, 128], strides = [1, 1]} : vector<16x128xf32> to vector<2x128xf32>
    %cst_13 = arith.constant dense<0.000000e+00> : vector<2x128xf32>
    %29 = tpu.matmul %26, %2, %cst_13 {dimension_numbers = #tpu.dot_dimension_numbers<[1], [0], [0], [1], [0, 0, 1, 1], [], []>} : vector<2x32xf32>, vector<32x128xf32>, vector<2x128xf32> -> vector<2x128xf32>
    %30 = arith.addf %28, %29 : vector<2x128xf32>
    %31 = arith.negf %30 : vector<2x128xf32>
    %32 = math.exp %31 : vector<2x128xf32>
    %cst_14 = arith.constant 1.000000e+00 : f32
    %33 = vector.broadcast %cst_14 : f32 to vector<2x128xf32>
    %34 = arith.addf %33, %32 : vector<2x128xf32>
    %35 = arith.divf %33, %34 : vector<2x128xf32>
    %36 = math.tanh %30 : vector<2x128xf32>
    %37 = vector.extract_strided_slice %35 {offsets = [0, 0], sizes = [2, 32], strides = [1, 1]} : vector<2x128xf32> to vector<2x32xf32>
    %38 = vector.extract_strided_slice %35 {offsets = [0, 32], sizes = [2, 32], strides = [1, 1]} : vector<2x128xf32> to vector<2x32xf32>
    %39 = vector.extract_strided_slice %36 {offsets = [0, 64], sizes = [2, 32], strides = [1, 1]} : vector<2x128xf32> to vector<2x32xf32>
    %40 = vector.extract_strided_slice %35 {offsets = [0, 96], sizes = [2, 32], strides = [1, 1]} : vector<2x128xf32> to vector<2x32xf32>
    %41 = arith.mulf %38, %24 : vector<2x32xf32>
    %42 = arith.mulf %37, %39 : vector<2x32xf32>
    %43 = arith.addf %41, %42 : vector<2x32xf32>
    %44 = math.tanh %43 : vector<2x32xf32>
    %45 = arith.mulf %40, %44 : vector<2x32xf32>
    %c2 = arith.constant 2 : index
    %c0_15 = arith.constant 0 : index
    %46 = vector.load %arg10[%c2, %c0_15] : memref<16x32xf32, #tpu.memory_space<vmem>>, vector<2x32xf32>
    tpu.vector_store %arg10[%c2, %c0_15], %45 {strides = array<i32>} : memref<16x32xf32, #tpu.memory_space<vmem>>, vector<2x32xf32>,
    %47 = vector.extract_strided_slice %6 {offsets = [4, 0], sizes = [2, 128], strides = [1, 1]} : vector<16x128xf32> to vector<2x128xf32>
    %cst_16 = arith.constant dense<0.000000e+00> : vector<2x128xf32>
    %48 = tpu.matmul %45, %2, %cst_16 {dimension_numbers = #tpu.dot_dimension_numbers<[1], [0], [0], [1], [0, 0, 1, 1], [], []>} : vector<2x32xf32>, vector<32x128xf32>, vector<2x128xf32> -> vector<2x128xf32>
    %49 = arith.addf %47, %48 : vector<2x128xf32>
    %50 = arith.negf %49 : vector<2x128xf32>
    %51 = math.exp %50 : vector<2x128xf32>
    %cst_17 = arith.constant 1.000000e+00 : f32
    %52 = vector.broadcast %cst_17 : f32 to vector<2x128xf32>
    %53 = arith.addf %52, %51 : vector<2x128xf32>
    %54 = arith.divf %52, %53 : vector<2x128xf32>
    %55 = math.tanh %49 : vector<2x128xf32>
    %56 = vector.extract_strided_slice %54 {offsets = [0, 0], sizes = [2, 32], strides = [1, 1]} : vector<2x128xf32> to vector<2x32xf32>
    %57 = vector.extract_strided_slice %54 {offsets = [0, 32], sizes = [2, 32], strides = [1, 1]} : vector<2x128xf32> to vector<2x32xf32>
    %58 = vector.extract_strided_slice %55 {offsets = [0, 64], sizes = [2, 32], strides = [1, 1]} : vector<2x128xf32> to vector<2x32xf32>
    %59 = vector.extract_strided_slice %54 {offsets = [0, 96], sizes = [2, 32], strides = [1, 1]} : vector<2x128xf32> to vector<2x32xf32>
    %60 = arith.mulf %57, %43 : vector<2x32xf32>
    %61 = arith.mulf %56, %58 : vector<2x32xf32>
    %62 = arith.addf %60, %61 : vector<2x32xf32>
    %63 = math.tanh %62 : vector<2x32xf32>
    %64 = arith.mulf %59, %63 : vector<2x32xf32>
    %c4 = arith.constant 4 : index
    %c0_18 = arith.constant 0 : index
    %65 = vector.load %arg10[%c4, %c0_18] : memref<16x32xf32, #tpu.memory_space<vmem>>, vector<2x32xf32>
    tpu.vector_store %arg10[%c4, %c0_18], %64 {strides = array<i32>} : memref<16x32xf32, #tpu.memory_space<vmem>>, vector<2x32xf32>,
    %66 = vector.extract_strided_slice %6 {offsets = [6, 0], sizes = [2, 128], strides = [1, 1]} : vector<16x128xf32> to vector<2x128xf32>
    %cst_19 = arith.constant dense<0.000000e+00> : vector<2x128xf32>
    %67 = tpu.matmul %64, %2, %cst_19 {dimension_numbers = #tpu.dot_dimension_numbers<[1], [0], [0], [1], [0, 0, 1, 1], [], []>} : vector<2x32xf32>, vector<32x128xf32>, vector<2x128xf32> -> vector<2x128xf32>
    %68 = arith.addf %66, %67 : vector<2x128xf32>
    %69 = arith.negf %68 : vector<2x128xf32>
    %70 = math.exp %69 : vector<2x128xf32>
    %cst_20 = arith.constant 1.000000e+00 : f32
    %71 = vector.broadcast %cst_20 : f32 to vector<2x128xf32>
    %72 = arith.addf %71, %70 : vector<2x128xf32>
    %73 = arith.divf %71, %72 : vector<2x128xf32>
    %74 = math.tanh %68 : vector<2x128xf32>
    %75 = vector.extract_strided_slice %73 {offsets = [0, 0], sizes = [2, 32], strides = [1, 1]} : vector<2x128xf32> to vector<2x32xf32>
    %76 = vector.extract_strided_slice %73 {offsets = [0, 32], sizes = [2, 32], strides = [1, 1]} : vector<2x128xf32> to vector<2x32xf32>
    %77 = vector.extract_strided_slice %74 {offsets = [0, 64], sizes = [2, 32], strides = [1, 1]} : vector<2x128xf32> to vector<2x32xf32>
    %78 = vector.extract_strided_slice %73 {offsets = [0, 96], sizes = [2, 32], strides = [1, 1]} : vector<2x128xf32> to vector<2x32xf32>
    %79 = arith.mulf %76, %62 : vector<2x32xf32>
    %80 = arith.mulf %75, %77 : vector<2x32xf32>
    %81 = arith.addf %79, %80 : vector<2x32xf32>
    %82 = math.tanh %81 : vector<2x32xf32>
    %83 = arith.mulf %78, %82 : vector<2x32xf32>
    %c6 = arith.constant 6 : index
    %c0_21 = arith.constant 0 : index
    %84 = vector.load %arg10[%c6, %c0_21] : memref<16x32xf32, #tpu.memory_space<vmem>>, vector<2x32xf32>
    tpu.vector_store %arg10[%c6, %c0_21], %83 {strides = array<i32>} : memref<16x32xf32, #tpu.memory_space<vmem>>, vector<2x32xf32>,
    %85 = vector.extract_strided_slice %6 {offsets = [8, 0], sizes = [2, 128], strides = [1, 1]} : vector<16x128xf32> to vector<2x128xf32>
    %cst_22 = arith.constant dense<0.000000e+00> : vector<2x128xf32>
    %86 = tpu.matmul %83, %2, %cst_22 {dimension_numbers = #tpu.dot_dimension_numbers<[1], [0], [0], [1], [0, 0, 1, 1], [], []>} : vector<2x32xf32>, vector<32x128xf32>, vector<2x128xf32> -> vector<2x128xf32>
    %87 = arith.addf %85, %86 : vector<2x128xf32>
    %88 = arith.negf %87 : vector<2x128xf32>
    %89 = math.exp %88 : vector<2x128xf32>
    %cst_23 = arith.constant 1.000000e+00 : f32
    %90 = vector.broadcast %cst_23 : f32 to vector<2x128xf32>
    %91 = arith.addf %90, %89 : vector<2x128xf32>
    %92 = arith.divf %90, %91 : vector<2x128xf32>
    %93 = math.tanh %87 : vector<2x128xf32>
    %94 = vector.extract_strided_slice %92 {offsets = [0, 0], sizes = [2, 32], strides = [1, 1]} : vector<2x128xf32> to vector<2x32xf32>
    %95 = vector.extract_strided_slice %92 {offsets = [0, 32], sizes = [2, 32], strides = [1, 1]} : vector<2x128xf32> to vector<2x32xf32>
    %96 = vector.extract_strided_slice %93 {offsets = [0, 64], sizes = [2, 32], strides = [1, 1]} : vector<2x128xf32> to vector<2x32xf32>
    %97 = vector.extract_strided_slice %92 {offsets = [0, 96], sizes = [2, 32], strides = [1, 1]} : vector<2x128xf32> to vector<2x32xf32>
    %98 = arith.mulf %95, %81 : vector<2x32xf32>
    %99 = arith.mulf %94, %96 : vector<2x32xf32>
    %100 = arith.addf %98, %99 : vector<2x32xf32>
    %101 = math.tanh %100 : vector<2x32xf32>
    %102 = arith.mulf %97, %101 : vector<2x32xf32>
    %c8 = arith.constant 8 : index
    %c0_24 = arith.constant 0 : index
    %103 = vector.load %arg10[%c8, %c0_24] : memref<16x32xf32, #tpu.memory_space<vmem>>, vector<2x32xf32>
    tpu.vector_store %arg10[%c8, %c0_24], %102 {strides = array<i32>} : memref<16x32xf32, #tpu.memory_space<vmem>>, vector<2x32xf32>,
    %104 = vector.extract_strided_slice %6 {offsets = [10, 0], sizes = [2, 128], strides = [1, 1]} : vector<16x128xf32> to vector<2x128xf32>
    %cst_25 = arith.constant dense<0.000000e+00> : vector<2x128xf32>
    %105 = tpu.matmul %102, %2, %cst_25 {dimension_numbers = #tpu.dot_dimension_numbers<[1], [0], [0], [1], [0, 0, 1, 1], [], []>} : vector<2x32xf32>, vector<32x128xf32>, vector<2x128xf32> -> vector<2x128xf32>
    %106 = arith.addf %104, %105 : vector<2x128xf32>
    %107 = arith.negf %106 : vector<2x128xf32>
    %108 = math.exp %107 : vector<2x128xf32>
    %cst_26 = arith.constant 1.000000e+00 : f32
    %109 = vector.broadcast %cst_26 : f32 to vector<2x128xf32>
    %110 = arith.addf %109, %108 : vector<2x128xf32>
    %111 = arith.divf %109, %110 : vector<2x128xf32>
    %112 = math.tanh %106 : vector<2x128xf32>
    %113 = vector.extract_strided_slice %111 {offsets = [0, 0], sizes = [2, 32], strides = [1, 1]} : vector<2x128xf32> to vector<2x32xf32>
    %114 = vector.extract_strided_slice %111 {offsets = [0, 32], sizes = [2, 32], strides = [1, 1]} : vector<2x128xf32> to vector<2x32xf32>
    %115 = vector.extract_strided_slice %112 {offsets = [0, 64], sizes = [2, 32], strides = [1, 1]} : vector<2x128xf32> to vector<2x32xf32>
    %116 = vector.extract_strided_slice %111 {offsets = [0, 96], sizes = [2, 32], strides = [1, 1]} : vector<2x128xf32> to vector<2x32xf32>
    %117 = arith.mulf %114, %100 : vector<2x32xf32>
    %118 = arith.mulf %113, %115 : vector<2x32xf32>
    %119 = arith.addf %117, %118 : vector<2x32xf32>
    %120 = math.tanh %119 : vector<2x32xf32>
    %121 = arith.mulf %116, %120 : vector<2x32xf32>
    %c10 = arith.constant 10 : index
    %c0_27 = arith.constant 0 : index
    %122 = vector.load %arg10[%c10, %c0_27] : memref<16x32xf32, #tpu.memory_space<vmem>>, vector<2x32xf32>
    tpu.vector_store %arg10[%c10, %c0_27], %121 {strides = array<i32>} : memref<16x32xf32, #tpu.memory_space<vmem>>, vector<2x32xf32>,
    %123 = vector.extract_strided_slice %6 {offsets = [12, 0], sizes = [2, 128], strides = [1, 1]} : vector<16x128xf32> to vector<2x128xf32>
    %cst_28 = arith.constant dense<0.000000e+00> : vector<2x128xf32>
    %124 = tpu.matmul %121, %2, %cst_28 {dimension_numbers = #tpu.dot_dimension_numbers<[1], [0], [0], [1], [0, 0, 1, 1], [], []>} : vector<2x32xf32>, vector<32x128xf32>, vector<2x128xf32> -> vector<2x128xf32>
    %125 = arith.addf %123, %124 : vector<2x128xf32>
    %126 = arith.negf %125 : vector<2x128xf32>
    %127 = math.exp %126 : vector<2x128xf32>
    %cst_29 = arith.constant 1.000000e+00 : f32
    %128 = vector.broadcast %cst_29 : f32 to vector<2x128xf32>
    %129 = arith.addf %128, %127 : vector<2x128xf32>
    %130 = arith.divf %128, %129 : vector<2x128xf32>
    %131 = math.tanh %125 : vector<2x128xf32>
    %132 = vector.extract_strided_slice %130 {offsets = [0, 0], sizes = [2, 32], strides = [1, 1]} : vector<2x128xf32> to vector<2x32xf32>
    %133 = vector.extract_strided_slice %130 {offsets = [0, 32], sizes = [2, 32], strides = [1, 1]} : vector<2x128xf32> to vector<2x32xf32>
    %134 = vector.extract_strided_slice %131 {offsets = [0, 64], sizes = [2, 32], strides = [1, 1]} : vector<2x128xf32> to vector<2x32xf32>
    %135 = vector.extract_strided_slice %130 {offsets = [0, 96], sizes = [2, 32], strides = [1, 1]} : vector<2x128xf32> to vector<2x32xf32>
    %136 = arith.mulf %133, %119 : vector<2x32xf32>
    %137 = arith.mulf %132, %134 : vector<2x32xf32>
    %138 = arith.addf %136, %137 : vector<2x32xf32>
    %139 = math.tanh %138 : vector<2x32xf32>
    %140 = arith.mulf %135, %139 : vector<2x32xf32>
    %c12 = arith.constant 12 : index
    %c0_30 = arith.constant 0 : index
    %141 = vector.load %arg10[%c12, %c0_30] : memref<16x32xf32, #tpu.memory_space<vmem>>, vector<2x32xf32>
    tpu.vector_store %arg10[%c12, %c0_30], %140 {strides = array<i32>} : memref<16x32xf32, #tpu.memory_space<vmem>>, vector<2x32xf32>,
    %142 = vector.extract_strided_slice %6 {offsets = [14, 0], sizes = [2, 128], strides = [1, 1]} : vector<16x128xf32> to vector<2x128xf32>
    %cst_31 = arith.constant dense<0.000000e+00> : vector<2x128xf32>
    %143 = tpu.matmul %140, %2, %cst_31 {dimension_numbers = #tpu.dot_dimension_numbers<[1], [0], [0], [1], [0, 0, 1, 1], [], []>} : vector<2x32xf32>, vector<32x128xf32>, vector<2x128xf32> -> vector<2x128xf32>
    %144 = arith.addf %142, %143 : vector<2x128xf32>
    %145 = arith.negf %144 : vector<2x128xf32>
    %146 = math.exp %145 : vector<2x128xf32>
    %cst_32 = arith.constant 1.000000e+00 : f32
    %147 = vector.broadcast %cst_32 : f32 to vector<2x128xf32>
    %148 = arith.addf %147, %146 : vector<2x128xf32>
    %149 = arith.divf %147, %148 : vector<2x128xf32>
    %150 = math.tanh %144 : vector<2x128xf32>
    %151 = vector.extract_strided_slice %149 {offsets = [0, 0], sizes = [2, 32], strides = [1, 1]} : vector<2x128xf32> to vector<2x32xf32>
    %152 = vector.extract_strided_slice %149 {offsets = [0, 32], sizes = [2, 32], strides = [1, 1]} : vector<2x128xf32> to vector<2x32xf32>
    %153 = vector.extract_strided_slice %150 {offsets = [0, 64], sizes = [2, 32], strides = [1, 1]} : vector<2x128xf32> to vector<2x32xf32>
    %154 = vector.extract_strided_slice %149 {offsets = [0, 96], sizes = [2, 32], strides = [1, 1]} : vector<2x128xf32> to vector<2x32xf32>
    %155 = arith.mulf %152, %138 : vector<2x32xf32>
    %156 = arith.mulf %151, %153 : vector<2x32xf32>
    %157 = arith.addf %155, %156 : vector<2x32xf32>
    %158 = math.tanh %157 : vector<2x32xf32>
    %159 = arith.mulf %154, %158 : vector<2x32xf32>
    %c14 = arith.constant 14 : index
    %c0_33 = arith.constant 0 : index
    %160 = vector.load %arg10[%c14, %c0_33] : memref<16x32xf32, #tpu.memory_space<vmem>>, vector<2x32xf32>
    tpu.vector_store %arg10[%c14, %c0_33], %159 {strides = array<i32>} : memref<16x32xf32, #tpu.memory_space<vmem>>, vector<2x32xf32>,
    %c0_34 = arith.constant 0 : index
    %c0_35 = arith.constant 0 : index
    %161 = vector.load %arg10[%c0_34, %c0_35] : memref<16x32xf32, #tpu.memory_space<vmem>>, vector<16x32xf32>
    %c0_36 = arith.constant 0 : index
    %c0_37 = arith.constant 0 : index
    %162 = vector.load %arg4[%c0_36, %c0_37] : memref<32x128xf32, #tpu.memory_space<vmem>>, vector<32x128xf32>
    %c0_38 = arith.constant 0 : index
    %c0_39 = arith.constant 0 : index
    %163 = vector.load %arg5[%c0_38, %c0_39] : memref<32x128xf32, #tpu.memory_space<vmem>>, vector<32x128xf32>
    %c0_40 = arith.constant 0 : index
    %c0_41 = arith.constant 0 : index
    %164 = vector.load %arg6[%c0_40, %c0_41] : memref<1x128xf32, #tpu.memory_space<vmem>>, vector<1x128xf32>
    %cst_42 = arith.constant dense<0.000000e+00> : vector<16x128xf32>
    %165 = tpu.matmul %161, %162, %cst_42 {dimension_numbers = #tpu.dot_dimension_numbers<[1], [0], [0], [1], [0, 0, 1, 1], [], []>} : vector<16x32xf32>, vector<32x128xf32>, vector<16x128xf32> -> vector<16x128xf32>
    %166 = vector.broadcast %164 : vector<1x128xf32> to vector<16x128xf32>
    %167 = arith.addf %165, %166 : vector<16x128xf32>
    %cst_43 = arith.constant 0.000000e+00 : f32
    %168 = vector.broadcast %cst_43 : f32 to vector<2x32xf32>
    %cst_44 = arith.constant 0.000000e+00 : f32
    %169 = vector.broadcast %cst_44 : f32 to vector<2x32xf32>
    %170 = vector.extract_strided_slice %167 {offsets = [0, 0], sizes = [2, 128], strides = [1, 1]} : vector<16x128xf32> to vector<2x128xf32>
    %cst_45 = arith.constant dense<0.000000e+00> : vector<2x128xf32>
    %171 = tpu.matmul %168, %163, %cst_45 {dimension_numbers = #tpu.dot_dimension_numbers<[1], [0], [0], [1], [0, 0, 1, 1], [], []>} : vector<2x32xf32>, vector<32x128xf32>, vector<2x128xf32> -> vector<2x128xf32>
    %172 = arith.addf %170, %171 : vector<2x128xf32>
    %173 = arith.negf %172 : vector<2x128xf32>
    %174 = math.exp %173 : vector<2x128xf32>
    %cst_46 = arith.constant 1.000000e+00 : f32
    %175 = vector.broadcast %cst_46 : f32 to vector<2x128xf32>
    %176 = arith.addf %175, %174 : vector<2x128xf32>
    %177 = arith.divf %175, %176 : vector<2x128xf32>
    %178 = math.tanh %172 : vector<2x128xf32>
    %179 = vector.extract_strided_slice %177 {offsets = [0, 0], sizes = [2, 32], strides = [1, 1]} : vector<2x128xf32> to vector<2x32xf32>
    %180 = vector.extract_strided_slice %177 {offsets = [0, 32], sizes = [2, 32], strides = [1, 1]} : vector<2x128xf32> to vector<2x32xf32>
    %181 = vector.extract_strided_slice %178 {offsets = [0, 64], sizes = [2, 32], strides = [1, 1]} : vector<2x128xf32> to vector<2x32xf32>
    %182 = vector.extract_strided_slice %177 {offsets = [0, 96], sizes = [2, 32], strides = [1, 1]} : vector<2x128xf32> to vector<2x32xf32>
    %183 = arith.mulf %180, %169 : vector<2x32xf32>
    %184 = arith.mulf %179, %181 : vector<2x32xf32>
    %185 = arith.addf %183, %184 : vector<2x32xf32>
    %186 = math.tanh %185 : vector<2x32xf32>
    %187 = arith.mulf %182, %186 : vector<2x32xf32>
    %188 = vector.extract_strided_slice %187 {offsets = [1, 0], sizes = [1, 32], strides = [1, 1]} : vector<2x32xf32> to vector<1x32xf32>
    %c0_47 = arith.constant 0 : index
    %c0_48 = arith.constant 0 : index
    %189 = vector.load %arg11[%c0_47, %c0_48] : memref<8x32xf32, #tpu.memory_space<vmem>>, vector<1x32xf32>
    tpu.vector_store %arg11[%c0_47, %c0_48], %188 {strides = array<i32>} : memref<8x32xf32, #tpu.memory_space<vmem>>, vector<1x32xf32>,
    %190 = vector.extract_strided_slice %167 {offsets = [2, 0], sizes = [2, 128], strides = [1, 1]} : vector<16x128xf32> to vector<2x128xf32>
    %cst_49 = arith.constant dense<0.000000e+00> : vector<2x128xf32>
    %191 = tpu.matmul %187, %163, %cst_49 {dimension_numbers = #tpu.dot_dimension_numbers<[1], [0], [0], [1], [0, 0, 1, 1], [], []>} : vector<2x32xf32>, vector<32x128xf32>, vector<2x128xf32> -> vector<2x128xf32>
    %192 = arith.addf %190, %191 : vector<2x128xf32>
    %193 = arith.negf %192 : vector<2x128xf32>
    %194 = math.exp %193 : vector<2x128xf32>
    %cst_50 = arith.constant 1.000000e+00 : f32
    %195 = vector.broadcast %cst_50 : f32 to vector<2x128xf32>
    %196 = arith.addf %195, %194 : vector<2x128xf32>
    %197 = arith.divf %195, %196 : vector<2x128xf32>
    %198 = math.tanh %192 : vector<2x128xf32>
    %199 = vector.extract_strided_slice %197 {offsets = [0, 0], sizes = [2, 32], strides = [1, 1]} : vector<2x128xf32> to vector<2x32xf32>
    %200 = vector.extract_strided_slice %197 {offsets = [0, 32], sizes = [2, 32], strides = [1, 1]} : vector<2x128xf32> to vector<2x32xf32>
    %201 = vector.extract_strided_slice %198 {offsets = [0, 64], sizes = [2, 32], strides = [1, 1]} : vector<2x128xf32> to vector<2x32xf32>
    %202 = vector.extract_strided_slice %197 {offsets = [0, 96], sizes = [2, 32], strides = [1, 1]} : vector<2x128xf32> to vector<2x32xf32>
    %203 = arith.mulf %200, %185 : vector<2x32xf32>
    %204 = arith.mulf %199, %201 : vector<2x32xf32>
    %205 = arith.addf %203, %204 : vector<2x32xf32>
    %206 = math.tanh %205 : vector<2x32xf32>
    %207 = arith.mulf %202, %206 : vector<2x32xf32>
    %208 = vector.extract_strided_slice %207 {offsets = [1, 0], sizes = [1, 32], strides = [1, 1]} : vector<2x32xf32> to vector<1x32xf32>
    %c1 = arith.constant 1 : index
    %c0_51 = arith.constant 0 : index
    %209 = vector.load %arg11[%c1, %c0_51] : memref<8x32xf32, #tpu.memory_space<vmem>>, vector<1x32xf32>
    tpu.vector_store %arg11[%c1, %c0_51], %208 {strides = array<i32>} : memref<8x32xf32, #tpu.memory_space<vmem>>, vector<1x32xf32>,
    %210 = vector.extract_strided_slice %167 {offsets = [4, 0], sizes = [2, 128], strides = [1, 1]} : vector<16x128xf32> to vector<2x128xf32>
    %cst_52 = arith.constant dense<0.000000e+00> : vector<2x128xf32>
    %211 = tpu.matmul %207, %163, %cst_52 {dimension_numbers = #tpu.dot_dimension_numbers<[1], [0], [0], [1], [0, 0, 1, 1], [], []>} : vector<2x32xf32>, vector<32x128xf32>, vector<2x128xf32> -> vector<2x128xf32>
    %212 = arith.addf %210, %211 : vector<2x128xf32>
    %213 = arith.negf %212 : vector<2x128xf32>
    %214 = math.exp %213 : vector<2x128xf32>
    %cst_53 = arith.constant 1.000000e+00 : f32
    %215 = vector.broadcast %cst_53 : f32 to vector<2x128xf32>
    %216 = arith.addf %215, %214 : vector<2x128xf32>
    %217 = arith.divf %215, %216 : vector<2x128xf32>
    %218 = math.tanh %212 : vector<2x128xf32>
    %219 = vector.extract_strided_slice %217 {offsets = [0, 0], sizes = [2, 32], strides = [1, 1]} : vector<2x128xf32> to vector<2x32xf32>
    %220 = vector.extract_strided_slice %217 {offsets = [0, 32], sizes = [2, 32], strides = [1, 1]} : vector<2x128xf32> to vector<2x32xf32>
    %221 = vector.extract_strided_slice %218 {offsets = [0, 64], sizes = [2, 32], strides = [1, 1]} : vector<2x128xf32> to vector<2x32xf32>
    %222 = vector.extract_strided_slice %217 {offsets = [0, 96], sizes = [2, 32], strides = [1, 1]} : vector<2x128xf32> to vector<2x32xf32>
    %223 = arith.mulf %220, %205 : vector<2x32xf32>
    %224 = arith.mulf %219, %221 : vector<2x32xf32>
    %225 = arith.addf %223, %224 : vector<2x32xf32>
    %226 = math.tanh %225 : vector<2x32xf32>
    %227 = arith.mulf %222, %226 : vector<2x32xf32>
    %228 = vector.extract_strided_slice %227 {offsets = [1, 0], sizes = [1, 32], strides = [1, 1]} : vector<2x32xf32> to vector<1x32xf32>
    %c2_54 = arith.constant 2 : index
    %c0_55 = arith.constant 0 : index
    %229 = vector.load %arg11[%c2_54, %c0_55] : memref<8x32xf32, #tpu.memory_space<vmem>>, vector<1x32xf32>
    tpu.vector_store %arg11[%c2_54, %c0_55], %228 {strides = array<i32>} : memref<8x32xf32, #tpu.memory_space<vmem>>, vector<1x32xf32>,
    %230 = vector.extract_strided_slice %167 {offsets = [6, 0], sizes = [2, 128], strides = [1, 1]} : vector<16x128xf32> to vector<2x128xf32>
    %cst_56 = arith.constant dense<0.000000e+00> : vector<2x128xf32>
    %231 = tpu.matmul %227, %163, %cst_56 {dimension_numbers = #tpu.dot_dimension_numbers<[1], [0], [0], [1], [0, 0, 1, 1], [], []>} : vector<2x32xf32>, vector<32x128xf32>, vector<2x128xf32> -> vector<2x128xf32>
    %232 = arith.addf %230, %231 : vector<2x128xf32>
    %233 = arith.negf %232 : vector<2x128xf32>
    %234 = math.exp %233 : vector<2x128xf32>
    %cst_57 = arith.constant 1.000000e+00 : f32
    %235 = vector.broadcast %cst_57 : f32 to vector<2x128xf32>
    %236 = arith.addf %235, %234 : vector<2x128xf32>
    %237 = arith.divf %235, %236 : vector<2x128xf32>
    %238 = math.tanh %232 : vector<2x128xf32>
    %239 = vector.extract_strided_slice %237 {offsets = [0, 0], sizes = [2, 32], strides = [1, 1]} : vector<2x128xf32> to vector<2x32xf32>
    %240 = vector.extract_strided_slice %237 {offsets = [0, 32], sizes = [2, 32], strides = [1, 1]} : vector<2x128xf32> to vector<2x32xf32>
    %241 = vector.extract_strided_slice %238 {offsets = [0, 64], sizes = [2, 32], strides = [1, 1]} : vector<2x128xf32> to vector<2x32xf32>
    %242 = vector.extract_strided_slice %237 {offsets = [0, 96], sizes = [2, 32], strides = [1, 1]} : vector<2x128xf32> to vector<2x32xf32>
    %243 = arith.mulf %240, %225 : vector<2x32xf32>
    %244 = arith.mulf %239, %241 : vector<2x32xf32>
    %245 = arith.addf %243, %244 : vector<2x32xf32>
    %246 = math.tanh %245 : vector<2x32xf32>
    %247 = arith.mulf %242, %246 : vector<2x32xf32>
    %248 = vector.extract_strided_slice %247 {offsets = [1, 0], sizes = [1, 32], strides = [1, 1]} : vector<2x32xf32> to vector<1x32xf32>
    %c3 = arith.constant 3 : index
    %c0_58 = arith.constant 0 : index
    %249 = vector.load %arg11[%c3, %c0_58] : memref<8x32xf32, #tpu.memory_space<vmem>>, vector<1x32xf32>
    tpu.vector_store %arg11[%c3, %c0_58], %248 {strides = array<i32>} : memref<8x32xf32, #tpu.memory_space<vmem>>, vector<1x32xf32>,
    %250 = vector.extract_strided_slice %167 {offsets = [8, 0], sizes = [2, 128], strides = [1, 1]} : vector<16x128xf32> to vector<2x128xf32>
    %cst_59 = arith.constant dense<0.000000e+00> : vector<2x128xf32>
    %251 = tpu.matmul %247, %163, %cst_59 {dimension_numbers = #tpu.dot_dimension_numbers<[1], [0], [0], [1], [0, 0, 1, 1], [], []>} : vector<2x32xf32>, vector<32x128xf32>, vector<2x128xf32> -> vector<2x128xf32>
    %252 = arith.addf %250, %251 : vector<2x128xf32>
    %253 = arith.negf %252 : vector<2x128xf32>
    %254 = math.exp %253 : vector<2x128xf32>
    %cst_60 = arith.constant 1.000000e+00 : f32
    %255 = vector.broadcast %cst_60 : f32 to vector<2x128xf32>
    %256 = arith.addf %255, %254 : vector<2x128xf32>
    %257 = arith.divf %255, %256 : vector<2x128xf32>
    %258 = math.tanh %252 : vector<2x128xf32>
    %259 = vector.extract_strided_slice %257 {offsets = [0, 0], sizes = [2, 32], strides = [1, 1]} : vector<2x128xf32> to vector<2x32xf32>
    %260 = vector.extract_strided_slice %257 {offsets = [0, 32], sizes = [2, 32], strides = [1, 1]} : vector<2x128xf32> to vector<2x32xf32>
    %261 = vector.extract_strided_slice %258 {offsets = [0, 64], sizes = [2, 32], strides = [1, 1]} : vector<2x128xf32> to vector<2x32xf32>
    %262 = vector.extract_strided_slice %257 {offsets = [0, 96], sizes = [2, 32], strides = [1, 1]} : vector<2x128xf32> to vector<2x32xf32>
    %263 = arith.mulf %260, %245 : vector<2x32xf32>
    %264 = arith.mulf %259, %261 : vector<2x32xf32>
    %265 = arith.addf %263, %264 : vector<2x32xf32>
    %266 = math.tanh %265 : vector<2x32xf32>
    %267 = arith.mulf %262, %266 : vector<2x32xf32>
    %268 = vector.extract_strided_slice %267 {offsets = [1, 0], sizes = [1, 32], strides = [1, 1]} : vector<2x32xf32> to vector<1x32xf32>
    %c4_61 = arith.constant 4 : index
    %c0_62 = arith.constant 0 : index
    %269 = vector.load %arg11[%c4_61, %c0_62] : memref<8x32xf32, #tpu.memory_space<vmem>>, vector<1x32xf32>
    tpu.vector_store %arg11[%c4_61, %c0_62], %268 {strides = array<i32>} : memref<8x32xf32, #tpu.memory_space<vmem>>, vector<1x32xf32>,
    %270 = vector.extract_strided_slice %167 {offsets = [10, 0], sizes = [2, 128], strides = [1, 1]} : vector<16x128xf32> to vector<2x128xf32>
    %cst_63 = arith.constant dense<0.000000e+00> : vector<2x128xf32>
    %271 = tpu.matmul %267, %163, %cst_63 {dimension_numbers = #tpu.dot_dimension_numbers<[1], [0], [0], [1], [0, 0, 1, 1], [], []>} : vector<2x32xf32>, vector<32x128xf32>, vector<2x128xf32> -> vector<2x128xf32>
    %272 = arith.addf %270, %271 : vector<2x128xf32>
    %273 = arith.negf %272 : vector<2x128xf32>
    %274 = math.exp %273 : vector<2x128xf32>
    %cst_64 = arith.constant 1.000000e+00 : f32
    %275 = vector.broadcast %cst_64 : f32 to vector<2x128xf32>
    %276 = arith.addf %275, %274 : vector<2x128xf32>
    %277 = arith.divf %275, %276 : vector<2x128xf32>
    %278 = math.tanh %272 : vector<2x128xf32>
    %279 = vector.extract_strided_slice %277 {offsets = [0, 0], sizes = [2, 32], strides = [1, 1]} : vector<2x128xf32> to vector<2x32xf32>
    %280 = vector.extract_strided_slice %277 {offsets = [0, 32], sizes = [2, 32], strides = [1, 1]} : vector<2x128xf32> to vector<2x32xf32>
    %281 = vector.extract_strided_slice %278 {offsets = [0, 64], sizes = [2, 32], strides = [1, 1]} : vector<2x128xf32> to vector<2x32xf32>
    %282 = vector.extract_strided_slice %277 {offsets = [0, 96], sizes = [2, 32], strides = [1, 1]} : vector<2x128xf32> to vector<2x32xf32>
    %283 = arith.mulf %280, %265 : vector<2x32xf32>
    %284 = arith.mulf %279, %281 : vector<2x32xf32>
    %285 = arith.addf %283, %284 : vector<2x32xf32>
    %286 = math.tanh %285 : vector<2x32xf32>
    %287 = arith.mulf %282, %286 : vector<2x32xf32>
    %288 = vector.extract_strided_slice %287 {offsets = [1, 0], sizes = [1, 32], strides = [1, 1]} : vector<2x32xf32> to vector<1x32xf32>
    %c5 = arith.constant 5 : index
    %c0_65 = arith.constant 0 : index
    %289 = vector.load %arg11[%c5, %c0_65] : memref<8x32xf32, #tpu.memory_space<vmem>>, vector<1x32xf32>
    tpu.vector_store %arg11[%c5, %c0_65], %288 {strides = array<i32>} : memref<8x32xf32, #tpu.memory_space<vmem>>, vector<1x32xf32>,
    %290 = vector.extract_strided_slice %167 {offsets = [12, 0], sizes = [2, 128], strides = [1, 1]} : vector<16x128xf32> to vector<2x128xf32>
    %cst_66 = arith.constant dense<0.000000e+00> : vector<2x128xf32>
    %291 = tpu.matmul %287, %163, %cst_66 {dimension_numbers = #tpu.dot_dimension_numbers<[1], [0], [0], [1], [0, 0, 1, 1], [], []>} : vector<2x32xf32>, vector<32x128xf32>, vector<2x128xf32> -> vector<2x128xf32>
    %292 = arith.addf %290, %291 : vector<2x128xf32>
    %293 = arith.negf %292 : vector<2x128xf32>
    %294 = math.exp %293 : vector<2x128xf32>
    %cst_67 = arith.constant 1.000000e+00 : f32
    %295 = vector.broadcast %cst_67 : f32 to vector<2x128xf32>
    %296 = arith.addf %295, %294 : vector<2x128xf32>
    %297 = arith.divf %295, %296 : vector<2x128xf32>
    %298 = math.tanh %292 : vector<2x128xf32>
    %299 = vector.extract_strided_slice %297 {offsets = [0, 0], sizes = [2, 32], strides = [1, 1]} : vector<2x128xf32> to vector<2x32xf32>
    %300 = vector.extract_strided_slice %297 {offsets = [0, 32], sizes = [2, 32], strides = [1, 1]} : vector<2x128xf32> to vector<2x32xf32>
    %301 = vector.extract_strided_slice %298 {offsets = [0, 64], sizes = [2, 32], strides = [1, 1]} : vector<2x128xf32> to vector<2x32xf32>
    %302 = vector.extract_strided_slice %297 {offsets = [0, 96], sizes = [2, 32], strides = [1, 1]} : vector<2x128xf32> to vector<2x32xf32>
    %303 = arith.mulf %300, %285 : vector<2x32xf32>
    %304 = arith.mulf %299, %301 : vector<2x32xf32>
    %305 = arith.addf %303, %304 : vector<2x32xf32>
    %306 = math.tanh %305 : vector<2x32xf32>
    %307 = arith.mulf %302, %306 : vector<2x32xf32>
    %308 = vector.extract_strided_slice %307 {offsets = [1, 0], sizes = [1, 32], strides = [1, 1]} : vector<2x32xf32> to vector<1x32xf32>
    %c6_68 = arith.constant 6 : index
    %c0_69 = arith.constant 0 : index
    %309 = vector.load %arg11[%c6_68, %c0_69] : memref<8x32xf32, #tpu.memory_space<vmem>>, vector<1x32xf32>
    tpu.vector_store %arg11[%c6_68, %c0_69], %308 {strides = array<i32>} : memref<8x32xf32, #tpu.memory_space<vmem>>, vector<1x32xf32>,
    %310 = vector.extract_strided_slice %167 {offsets = [14, 0], sizes = [2, 128], strides = [1, 1]} : vector<16x128xf32> to vector<2x128xf32>
    %cst_70 = arith.constant dense<0.000000e+00> : vector<2x128xf32>
    %311 = tpu.matmul %307, %163, %cst_70 {dimension_numbers = #tpu.dot_dimension_numbers<[1], [0], [0], [1], [0, 0, 1, 1], [], []>} : vector<2x32xf32>, vector<32x128xf32>, vector<2x128xf32> -> vector<2x128xf32>
    %312 = arith.addf %310, %311 : vector<2x128xf32>
    %313 = arith.negf %312 : vector<2x128xf32>
    %314 = math.exp %313 : vector<2x128xf32>
    %cst_71 = arith.constant 1.000000e+00 : f32
    %315 = vector.broadcast %cst_71 : f32 to vector<2x128xf32>
    %316 = arith.addf %315, %314 : vector<2x128xf32>
    %317 = arith.divf %315, %316 : vector<2x128xf32>
    %318 = math.tanh %312 : vector<2x128xf32>
    %319 = vector.extract_strided_slice %317 {offsets = [0, 0], sizes = [2, 32], strides = [1, 1]} : vector<2x128xf32> to vector<2x32xf32>
    %320 = vector.extract_strided_slice %317 {offsets = [0, 32], sizes = [2, 32], strides = [1, 1]} : vector<2x128xf32> to vector<2x32xf32>
    %321 = vector.extract_strided_slice %318 {offsets = [0, 64], sizes = [2, 32], strides = [1, 1]} : vector<2x128xf32> to vector<2x32xf32>
    %322 = vector.extract_strided_slice %317 {offsets = [0, 96], sizes = [2, 32], strides = [1, 1]} : vector<2x128xf32> to vector<2x32xf32>
    %323 = arith.mulf %320, %305 : vector<2x32xf32>
    %324 = arith.mulf %319, %321 : vector<2x32xf32>
    %325 = arith.addf %323, %324 : vector<2x32xf32>
    %326 = math.tanh %325 : vector<2x32xf32>
    %327 = arith.mulf %322, %326 : vector<2x32xf32>
    %328 = vector.extract_strided_slice %327 {offsets = [1, 0], sizes = [1, 32], strides = [1, 1]} : vector<2x32xf32> to vector<1x32xf32>
    %c7 = arith.constant 7 : index
    %c0_72 = arith.constant 0 : index
    %329 = vector.load %arg11[%c7, %c0_72] : memref<8x32xf32, #tpu.memory_space<vmem>>, vector<1x32xf32>
    tpu.vector_store %arg11[%c7, %c0_72], %328 {strides = array<i32>} : memref<8x32xf32, #tpu.memory_space<vmem>>, vector<1x32xf32>,
    %c0_73 = arith.constant 0 : index
    %c0_74 = arith.constant 0 : index
    %330 = vector.load %arg11[%c0_73, %c0_74] : memref<8x32xf32, #tpu.memory_space<vmem>>, vector<8x32xf32>
    %c0_75 = arith.constant 0 : index
    %c0_76 = arith.constant 0 : index
    %331 = vector.load %arg7[%c0_75, %c0_76] : memref<32x5xf32, #tpu.memory_space<vmem>>, vector<32x5xf32>
    %cst_77 = arith.constant dense<0.000000e+00> : vector<8x5xf32>
    %332 = tpu.matmul %330, %331, %cst_77 {dimension_numbers = #tpu.dot_dimension_numbers<[1], [0], [0], [1], [0, 0, 1, 1], [], []>} : vector<8x32xf32>, vector<32x5xf32>, vector<8x5xf32> -> vector<8x5xf32>
    %c0_78 = arith.constant 0 : index
    %c0_79 = arith.constant 0 : index
    %333 = vector.load %arg8[%c0_78, %c0_79] : memref<1x5xf32, #tpu.memory_space<vmem>>, vector<1x5xf32>
    %334 = vector.broadcast %333 : vector<1x5xf32> to vector<8x5xf32>
    %335 = arith.addf %332, %334 : vector<8x5xf32>
    %c0_80 = arith.constant 0 : index
    %c0_81 = arith.constant 0 : index
    %336 = vector.load %arg9[%c0_80, %c0_81] : memref<8x5xf32, #tpu.memory_space<vmem>>, vector<8x5xf32>
    tpu.vector_store %arg9[%c0_80, %c0_81], %335 {strides = array<i32>} : memref<8x5xf32, #tpu.memory_space<vmem>>, vector<8x5xf32>,
    return
  }
}

</mosaic_0001>

<llo_original>
// kernel: tpu_custom_call.1
$region0: #{tpu_custom_call.1}
  #allocation0 [shape = 'u32[]', space=smem, size = 0x4, offset = 0x4, fixed_abs, tag = 'smem constant byte address 0x4 - core index']
  #allocation1 [shape = 'u32[144,128]{1,0:T(1,128)}', space=vmem, size = 0x12000, scoped, tag = 'internal scratch']
  #allocation2 [shape = 'f32[16,32]{1,0:T(8,128)}', space=vmem, size = 0x2000, scoped, tag = 'scratch operand']
  #allocation3 [shape = 'f32[8,32]{1,0:T(8,128)}', space=vmem, size = 0x1000, scoped, tag = 'scratch operand']
  %s0 = inlined_call_operand.vmem [shape: f32[16,4], index: 0, kind: input, shape index: {}]
  %s1 = inlined_call_operand.hbm [shape: f32[4,128], index: 1, kind: input, shape index: {}]
  %s2 = inlined_call_operand.vmem [shape: f32[32,128], index: 2, kind: input, shape index: {}]
  %s3 = inlined_call_operand.hbm [shape: f32[1,128], index: 3, kind: input, shape index: {}]
  %s4 = inlined_call_operand.vmem [shape: f32[32,128], index: 4, kind: input, shape index: {}]
  %s5 = inlined_call_operand.hbm [shape: f32[32,128], index: 5, kind: input, shape index: {}]
  %s6 = inlined_call_operand.hbm [shape: f32[1,128], index: 6, kind: input, shape index: {}]
  %s7 = inlined_call_operand.vmem [shape: f32[32,5], index: 7, kind: input, shape index: {}]
  %s8 = inlined_call_operand.vmem [shape: f32[1,5], index: 8, kind: input, shape index: {}]
  %s9 = inlined_call_operand.hbm [shape: f32[8,5], index: 9, kind: output, shape index: {}]
  %s10 = sld [smem:[#allocation0]]
  $region62: #{tpu_custom_call.1} parent=0
    _
  %s12 = ssub.s32 1, %s10
  %s13 = scalar_select 0, %s12, %s10
  $region1: #{tpu_custom_call.1} parent=0
    #allocation4 [shape = 'u8[2048]{0}', space=vmem, size = 0x800, scoped, tag = 'input window, operand 1, single buffered']
    #allocation5 [shape = 's32[1]{0}', space=sflag, size = 0x4, scoped, tag = 'scoped memory for tpu_custom_call.1']
    #allocation6 [shape = 's32[1]{0}', space=sflag, size = 0x4, scoped, tag = 'scoped memory for tpu_custom_call.1']
    #allocation7 [shape = 'u8[512]{0}', space=vmem, size = 0x400, scoped, tag = 'input window, operand 3, single buffered']
    #allocation8 [shape = 's32[1]{0}', space=sflag, size = 0x4, scoped, tag = 'scoped memory for tpu_custom_call.1']
    #allocation9 [shape = 'u8[16384]{0}', space=vmem, size = 0x4000, scoped, tag = 'input window, operand 5, single buffered']
    #allocation10 [shape = 'u8[512]{0}', space=vmem, size = 0x400, scoped, tag = 'input window, operand 6, single buffered']
    #allocation11 [shape = 's32[1]{0}', space=sflag, size = 0x4, scoped, tag = 'scoped memory for tpu_custom_call.1']
    #allocation12 [shape = 'u8[4096]{0}', space=vmem, size = 0x1000, scoped, tag = 'output window, operand 0, single buffered']
    %14 = vsyncpa [#allocation5], 0
    %15 = vsyncpa [#allocation8], 0
    %16 = vsyncpa [#allocation11], 0
    %17 = vsyncpa [#allocation6], 0
    // Predicated region
    $region2: #{tpu_custom_call.1} parent=1 // pred_check
      _
    $region3: #{tpu_custom_call.1} parent=1 // pred_check_branch
      %19 = sbr.rel (0) target = $region5
    $region4: #{tpu_custom_call.1} parent=1 // pred_region
      _
    $region5: #{tpu_custom_call.1} parent=1 // pred_fallthru
      _
    // Predicated region
    $region6: #{tpu_custom_call.1} parent=1 // pred_check
      _
    $region7: #{tpu_custom_call.1} parent=1 // pred_check_branch
      %21 = sbr.rel (0) target = $region9
    $region8: #{tpu_custom_call.1} parent=1 // pred_region
      %s23 = ssub.s32 64, 64
      %24 = vsyncadd [#allocation5], %s23
      %s26 = sshll.u32 [#allocation4], 4
      %s27 = int_to_ptr.vmem [resolvable:$true] %s26
      %29 = dma.hbm_to_vmem [thread:$0]  %s1, 64, %s27, [#allocation5]
    $region9: #{tpu_custom_call.1} parent=1 // pred_fallthru
      _
    // Predicated region
    $region10: #{tpu_custom_call.1} parent=1 // pred_check
      _
    $region11: #{tpu_custom_call.1} parent=1 // pred_check_branch
      %31 = sbr.rel (0) target = $region13
    $region12: #{tpu_custom_call.1} parent=1 // pred_region
      _
    $region13: #{tpu_custom_call.1} parent=1 // pred_fallthru
      _
    // Predicated region
    $region14: #{tpu_custom_call.1} parent=1 // pred_check
      _
    $region15: #{tpu_custom_call.1} parent=1 // pred_check_branch
      %33 = sbr.rel (0) target = $region17
    $region16: #{tpu_custom_call.1} parent=1 // pred_region
      %s35 = ssub.s32 16, 16
      %36 = vsyncadd [#allocation8], %s35
      %s38 = sshll.u32 [#allocation7], 4
      %s39 = int_to_ptr.vmem [resolvable:$true] %s38
      %41 = dma.hbm_to_vmem [thread:$0]  %s3, 16, %s39, [#allocation8]
    $region17: #{tpu_custom_call.1} parent=1 // pred_fallthru
      _
    // Predicated region
    $region18: #{tpu_custom_call.1} parent=1 // pred_check
      _
    $region19: #{tpu_custom_call.1} parent=1 // pred_check_branch
      %43 = sbr.rel (0) target = $region21
    $region20: #{tpu_custom_call.1} parent=1 // pred_region
      _
    $region21: #{tpu_custom_call.1} parent=1 // pred_fallthru
      _
    // Predicated region
    $region22: #{tpu_custom_call.1} parent=1 // pred_check
      _
    $region23: #{tpu_custom_call.1} parent=1 // pred_check_branch
      %45 = sbr.rel (0) target = $region25
    $region24: #{tpu_custom_call.1} parent=1 // pred_region
      %s47 = ssub.s32 512, 512
      %48 = vsyncadd [#allocation8], %s47
      %s49 = sshll.u32 [#allocation9], 4
      %s50 = int_to_ptr.vmem [resolvable:$true] %s49
      %55 = dma.hbm_to_vmem [thread:$0]  %s5, 512, %s50, [#allocation8], 128, 128, 8
    $region25: #{tpu_custom_call.1} parent=1 // pred_fallthru
      _
    // Predicated region
    $region26: #{tpu_custom_call.1} parent=1 // pred_check
      _
    $region27: #{tpu_custom_call.1} parent=1 // pred_check_branch
      %57 = sbr.rel (0) target = $region29
    $region28: #{tpu_custom_call.1} parent=1 // pred_region
      %s59 = ssub.s32 16, 16
      %60 = vsyncadd [#allocation11], %s59
      %s62 = sshll.u32 [#allocation10], 4
      %s63 = int_to_ptr.vmem [resolvable:$true] %s62
      %65 = dma.hbm_to_vmem [thread:$0]  %s6, 16, %s63, [#allocation11]
    $region29: #{tpu_custom_call.1} parent=1 // pred_fallthru
      _
    // Predicated region
    $region30: #{tpu_custom_call.1} parent=1 // pred_check
      _
    $region31: #{tpu_custom_call.1} parent=1 // pred_check_branch
      %67 = sbr.rel (0) target = $region33
    $region32: #{tpu_custom_call.1} parent=1 // pred_region
      _
    $region33: #{tpu_custom_call.1} parent=1 // pred_fallthru
      _
    // Predicated region
    $region34: #{tpu_custom_call.1} parent=1 // pred_check
      _
    $region35: #{tpu_custom_call.1} parent=1 // pred_check_branch
      %69 = sbr.rel (0) target = $region37
    $region36: #{tpu_custom_call.1} parent=1 // pred_region
      _
    $region37: #{tpu_custom_call.1} parent=1 // pred_fallthru
      _
    // Predicated region
    $region38: #{tpu_custom_call.1} parent=1 // pred_check
      _
    $region39: #{tpu_custom_call.1} parent=1 // pred_check_branch
      %71 = sbr.rel (0) target = $region41
    $region40: #{tpu_custom_call.1} parent=1 // pred_region
      %72 = dma.done [#allocation5], 64
    $region41: #{tpu_custom_call.1} parent=1 // pred_fallthru
      _
    // Predicated region
    $region42: #{tpu_custom_call.1} parent=1 // pred_check
      _
    $region43: #{tpu_custom_call.1} parent=1 // pred_check_branch
      %74 = sbr.rel (0) target = $region45
    $region44: #{tpu_custom_call.1} parent=1 // pred_region
      %75 = dma.done [#allocation8], 16
    $region45: #{tpu_custom_call.1} parent=1 // pred_fallthru
      _
    // Predicated region
    $region46: #{tpu_custom_call.1} parent=1 // pred_check
      _
    $region47: #{tpu_custom_call.1} parent=1 // pred_check_branch
      %77 = sbr.rel (0) target = $region49
    $region48: #{tpu_custom_call.1} parent=1 // pred_region
      %78 = dma.done [#allocation8], 512
    $region49: #{tpu_custom_call.1} parent=1 // pred_fallthru
      _
    // Predicated region
    $region50: #{tpu_custom_call.1} parent=1 // pred_check
      _
    $region51: #{tpu_custom_call.1} parent=1 // pred_check_branch
      %80 = sbr.rel (0) target = $region53
    $region52: #{tpu_custom_call.1} parent=1 // pred_region
      %81 = dma.done [#allocation11], 16
    $region53: #{tpu_custom_call.1} parent=1 // pred_fallthru
      _
    %v82 = vld [vmem:[%s0] sm:$0xff]
    %v83 = vld [vmem:[%s0 + $0x8] sm:$0xff]
    %v84 = vld [vmem:[#allocation4] sm:$0xf]
    %v85 = vld [vmem:[%s2] sm:$0xff]
    %v86 = vld [vmem:[%s2 + $0x8] sm:$0xff]
    %v87 = vld [vmem:[%s2 + $0x10] sm:$0xff]
    %v88 = vld [vmem:[%s2 + $0x18] sm:$0xff]
    %v89 = vld [vmem:[#allocation7] sm:$0x1]
    %v91 = vlaneseq
    %v92 = vshrl.u32 %v91, 7
    %v93 = vsub.s32 0, %v92
    %v94 = vrot.slane %v89, %v93
    %vm96 = vcmask 31744
    %v98 = vsel %vm96, %v82, 0
    %v101 = vsel %vm96, %v83, 0
    %vm103 = vcmask 1043456
    %v105 = vsel %vm103, %v84, 0
    %107 = vmatprep.subr.mxu0 0.0
    %108 = vmatpush1.msra.mxu0 0.0
    %109 = vmatprep.subr.mxu0 0.0
    %110 = vmatpush1.msra.mxu0 0.0
    %111 = vmatprep.subr.mxu0 0.0
    %112 = vmatpush1.msra.mxu0 0.0
    %113 = vmatprep.subr.mxu0 0.0
    %114 = vmatpush1.msra.mxu0 0.0
    %115 = vmatprep.subr.mxu0 0.0
    %116 = vmatpush1.msra.mxu0 0.0
    %117 = vmatprep.subr.mxu0 0.0
    %118 = vmatpush1.msra.mxu0 0.0
    %119 = vmatprep.subr.mxu0 0.0
    %120 = vmatpush1.msra.mxu0 0.0
    %121 = vmatprep.subr.mxu0 0.0
    %122 = vmatpush1.msra.mxu0 0.0
    %123 = vmatprep.subr.mxu0 0.0
    %124 = vmatpush1.msra.mxu0 0.0
    %125 = vmatprep.subr.mxu0 0.0
    %126 = vmatpush1.msra.mxu0 0.0
    %127 = vmatprep.subr.mxu0 0.0
    %128 = vmatpush1.msra.mxu0 0.0
    %129 = vmatprep.subr.mxu0 0.0
    %130 = vmatpush1.msra.mxu0 0.0
    %131 = vmatprep.subr.mxu0 0.0
    %132 = vmatpush1.msra.mxu0 0.0
    %133 = vmatprep.subr.mxu0 0.0
    %134 = vmatpush1.msra.mxu0 0.0
    %135 = vmatprep.subr.mxu0 0.0
    %136 = vmatpush1.msra.mxu0 0.0
    %137 = vmatprep.subr.mxu0 0.0
    %138 = vmatpush1.msra.mxu0 %v105
    %139 = vmatprep.subr.mxu0 0.0
    %140 = vmatpush2.msra.mxu0 0.0
    %141 = vmatprep.subr.mxu0 0.0
    %142 = vmatpush2.msra.mxu0 0.0
    %143 = vmatprep.subr.mxu0 0.0
    %144 = vmatpush2.msra.mxu0 0.0
    %145 = vmatprep.subr.mxu0 0.0
    %146 = vmatpush2.msra.mxu0 0.0
    %147 = vmatprep.subr.mxu0 0.0
    %148 = vmatpush2.msra.mxu0 0.0
    %149 = vmatprep.subr.mxu0 0.0
    %150 = vmatpush2.msra.mxu0 0.0
    %151 = vmatprep.subr.mxu0 0.0
    %152 = vmatpush2.msra.mxu0 0.0
    %153 = vmatprep.subr.mxu0 0.0
    %154 = vmatpush2.msra.mxu0 0.0
    %155 = vmatprep.subr.mxu0 0.0
    %156 = vmatpush2.msra.mxu0 0.0
    %157 = vmatprep.subr.mxu0 0.0
    %158 = vmatpush2.msra.mxu0 0.0
    %159 = vmatprep.subr.mxu0 0.0
    %160 = vmatpush2.msra.mxu0 0.0
    %161 = vmatprep.subr.mxu0 0.0
    %162 = vmatpush2.msra.mxu0 0.0
    %163 = vmatprep.subr.mxu0 0.0
    %164 = vmatpush2.msra.mxu0 0.0
    %165 = vmatprep.subr.mxu0 0.0
    %166 = vmatpush2.msra.mxu0 0.0
    %167 = vmatprep.subr.mxu0 0.0
    %168 = vmatpush2.msra.mxu0 0.0
    %169 = vmatprep.subr.mxu0 0.0
    %170 = vmatpush2.msra.mxu0 0.0
    %171 = vmatprep.mubr.f32.mxu0 0.0
    %172 = vmatmul.mubr.f32.gmra.mxu0 %v98
    %v173 = vpop.f32.mrf.mxu0
    %v174 = vadd.f32 %v94, %v173
    %v175 = vpop.f32.mrf.mxu0
    %176 = vmatprep.mubr.f32.mxu0 0.0
    %177 = vmatmul.mubr.f32.gmra.mxu0 %v101
    %v178 = vpop.f32.mrf.mxu0
    %v179 = vadd.f32 %v94, %v178
    %v180 = vpop.f32.mrf.mxu0
    %181 = vdwg.mxu0
    %vm182 = vcmask 261120
    %v184 = vsel %vm182, 0.0, 0
    %186 = vmatprep.subr.mxu0 0.0
    %187 = vmatpush1.msra.mxu0 0.0
    %188 = vmatprep.subr.mxu0 0.0
    %189 = vmatpush1.msra.mxu0 0.0
    %190 = vmatprep.subr.mxu0 0.0
    %191 = vmatpush1.msra.mxu0 0.0
    %192 = vmatprep.subr.mxu0 0.0
    %193 = vmatpush1.msra.mxu0 0.0
    %194 = vmatprep.subr.mxu0 0.0
    %195 = vmatpush1.msra.mxu0 0.0
    %196 = vmatprep.subr.mxu0 0.0
    %197 = vmatpush1.msra.mxu0 0.0
    %198 = vmatprep.subr.mxu0 0.0
    %199 = vmatpush1.msra.mxu0 0.0
    %200 = vmatprep.subr.mxu0 0.0
    %201 = vmatpush1.msra.mxu0 0.0
    %202 = vmatprep.subr.mxu0 0.0
    %203 = vmatpush1.msra.mxu0 0.0
    %204 = vmatprep.subr.mxu0 0.0
    %205 = vmatpush1.msra.mxu0 0.0
    %206 = vmatprep.subr.mxu0 0.0
    %207 = vmatpush1.msra.mxu0 0.0
    %208 = vmatprep.subr.mxu0 0.0
    %209 = vmatpush1.msra.mxu0 0.0
    %210 = vmatprep.subr.mxu0 0.0
    %211 = vmatpush1.msra.mxu0 %v88
    %212 = vmatprep.subr.mxu0 0.0
    %213 = vmatpush1.msra.mxu0 %v87
    %214 = vmatprep.subr.mxu0 0.0
    %215 = vmatpush1.msra.mxu0 %v86
    %216 = vmatprep.subr.mxu0 0.0
    %217 = vmatpush1.msra.mxu0 %v85
    %218 = vmatprep.subr.mxu0 0.0
    %219 = vmatpush2.msra.mxu0 0.0
    %220 = vmatprep.subr.mxu0 0.0
    %221 = vmatpush2.msra.mxu0 0.0
    %222 = vmatprep.subr.mxu0 0.0
    %223 = vmatpush2.msra.mxu0 0.0
    %224 = vmatprep.subr.mxu0 0.0
    %225 = vmatpush2.msra.mxu0 0.0
    %226 = vmatprep.subr.mxu0 0.0
    %227 = vmatpush2.msra.mxu0 0.0
    %228 = vmatprep.subr.mxu0 0.0
    %229 = vmatpush2.msra.mxu0 0.0
    %230 = vmatprep.subr.mxu0 0.0
    %231 = vmatpush2.msra.mxu0 0.0
    %232 = vmatprep.subr.mxu0 0.0
    %233 = vmatpush2.msra.mxu0 0.0
    %234 = vmatprep.subr.mxu0 0.0
    %235 = vmatpush2.msra.mxu0 0.0
    %236 = vmatprep.subr.mxu0 0.0
    %237 = vmatpush2.msra.mxu0 0.0
    %238 = vmatprep.subr.mxu0 0.0
    %239 = vmatpush2.msra.mxu0 0.0
    %240 = vmatprep.subr.mxu0 0.0
    %241 = vmatpush2.msra.mxu0 0.0
    %242 = vmatprep.subr.mxu0 0.0
    %243 = vmatpush2.msra.mxu0 0.0
    %244 = vmatprep.subr.mxu0 0.0
    %245 = vmatpush2.msra.mxu0 0.0
    %246 = vmatprep.subr.mxu0 0.0
    %247 = vmatpush2.msra.mxu0 0.0
    %248 = vmatprep.subr.mxu0 0.0
    %249 = vmatpush2.msra.mxu0 0.0
    %250 = vmatprep.mubr.f32.mxu0 0.0
    %251 = vmatmul.mubr.f32.gmra.mxu0 %v184
    %v252 = vpop.f32.mrf.mxu0
    %v253 = vadd.f32 0.0, %v252
    %v254 = vpop.f32.mrf.mxu0
    %255 = vdwg.mxu0
    %v256 = vadd.f32 %v174, %v253
    %v257 = vxor.u32 %v256, 2147483648
    %v258 = vmul.f32 %v257, 1.442695
    %v259 = vpow.pop %v258
    %v260 = vadd.f32 %v259, 1.0
    %v261 = vrcp.pop %v260
    %v262 = vmul.f32 1.0, %v261
    %v263 = vtanh.pop %v256
    %v264 = vmul.f32 %v262, 0.0
    %266 = vrot.lane.b32.xlu0 %v263, 64
    %v267 = vpop.permute.xlu0 %266
    %v269 = vmul.f32 %v262, %v267
    %271 = vrot.lane.b32.xlu0 %v269, 32
    %v272 = vpop.permute.xlu0 %271
    %v274 = vadd.f32 %v264, %v272
    %v275 = vtanh.pop %v274
    %277 = vrot.lane.b32.xlu0 %v275, 64
    %v278 = vpop.permute.xlu0 %277
    %v280 = vmul.f32 %v262, %v278
    %282 = vrot.lane.b32.xlu0 %v280, 32
    %v283 = vpop.permute.xlu0 %282
    %vm285 = vcmask 254976
    %286 = vst.msk [vmem:[#allocation2] sm:$0x3] %vm285, %v283
    %v287 = vsel %vm182, %v283, 0
    %289 = vmatprep.subr.mxu0 0.0
    %290 = vmatpush1.msra.mxu0 0.0
    %291 = vmatprep.subr.mxu0 0.0
    %292 = vmatpush1.msra.mxu0 0.0
    %293 = vmatprep.subr.mxu0 0.0
    %294 = vmatpush1.msra.mxu0 0.0
    %295 = vmatprep.subr.mxu0 0.0
    %296 = vmatpush1.msra.mxu0 0.0
    %297 = vmatprep.subr.mxu0 0.0
    %298 = vmatpush1.msra.mxu0 0.0
    %299 = vmatprep.subr.mxu0 0.0
    %300 = vmatpush1.msra.mxu0 0.0
    %301 = vmatprep.subr.mxu0 0.0
    %302 = vmatpush1.msra.mxu0 0.0
    %303 = vmatprep.subr.mxu0 0.0
    %304 = vmatpush1.msra.mxu0 0.0
    %305 = vmatprep.subr.mxu0 0.0
    %306 = vmatpush1.msra.mxu0 0.0
    %307 = vmatprep.subr.mxu0 0.0
    %308 = vmatpush1.msra.mxu0 0.0
    %309 = vmatprep.subr.mxu0 0.0
    %310 = vmatpush1.msra.mxu0 0.0
    %311 = vmatprep.subr.mxu0 0.0
    %312 = vmatpush1.msra.mxu0 0.0
    %313 = vmatprep.subr.mxu0 0.0
    %314 = vmatpush1.msra.mxu0 %v88
    %315 = vmatprep.subr.mxu0 0.0
    %316 = vmatpush1.msra.mxu0 %v87
    %317 = vmatprep.subr.mxu0 0.0
    %318 = vmatpush1.msra.mxu0 %v86
    %319 = vmatprep.subr.mxu0 0.0
    %320 = vmatpush1.msra.mxu0 %v85
    %321 = vmatprep.subr.mxu0 0.0
    %322 = vmatpush2.msra.mxu0 0.0
    %323 = vmatprep.subr.mxu0 0.0
    %324 = vmatpush2.msra.mxu0 0.0
    %325 = vmatprep.subr.mxu0 0.0
    %326 = vmatpush2.msra.mxu0 0.0
    %327 = vmatprep.subr.mxu0 0.0
    %328 = vmatpush2.msra.mxu0 0.0
    %329 = vmatprep.subr.mxu0 0.0
    %330 = vmatpush2.msra.mxu0 0.0
    %331 = vmatprep.subr.mxu0 0.0
    %332 = vmatpush2.msra.mxu0 0.0
    %333 = vmatprep.subr.mxu0 0.0
    %334 = vmatpush2.msra.mxu0 0.0
    %335 = vmatprep.subr.mxu0 0.0
    %336 = vmatpush2.msra.mxu0 0.0
    %337 = vmatprep.subr.mxu0 0.0
    %338 = vmatpush2.msra.mxu0 0.0
    %339 = vmatprep.subr.mxu0 0.0
    %340 = vmatpush2.msra.mxu0 0.0
    %341 = vmatprep.subr.mxu0 0.0
    %342 = vmatpush2.msra.mxu0 0.0
    %343 = vmatprep.subr.mxu0 0.0
    %344 = vmatpush2.msra.mxu0 0.0
    %345 = vmatprep.subr.mxu0 0.0
    %346 = vmatpush2.msra.mxu0 0.0
    %347 = vmatprep.subr.mxu0 0.0
    %348 = vmatpush2.msra.mxu0 0.0
    %349 = vmatprep.subr.mxu0 0.0
    %350 = vmatpush2.msra.mxu0 0.0
    %351 = vmatprep.subr.mxu0 0.0
    %352 = vmatpush2.msra.mxu0 0.0
    %353 = vmatprep.mubr.f32.mxu0 0.0
    %354 = vmatmul.mubr.f32.gmra.mxu0 %v287
    %v355 = vpop.f32.mrf.mxu0
    %v356 = vadd.f32 0.0, %v355
    %v357 = vpop.f32.mrf.mxu0
    %358 = vdwg.mxu0
    %v360 = vrot.slane %v356, 6
    %v362 = vadd.f32 %v174, %v360
    %v363 = vxor.u32 %v362, 2147483648
    %v364 = vmul.f32 %v363, 1.442695
    %v365 = vpow.pop %v364
    %v366 = vadd.f32 %v365, 1.0
    %v367 = vrcp.pop %v366
    %v368 = vmul.f32 1.0, %v367
    %v369 = vtanh.pop %v362
    %v371 = vrot.slane %v274, 6
    %v373 = vmul.f32 %v368, %v371
    %375 = vrot.lane.b32.xlu0 %v369, 64
    %v376 = vpop.permute.xlu0 %375
    %v378 = vmul.f32 %v368, %v376
    %380 = vrot.lane.b32.xlu0 %v378, 32
    %v381 = vpop.permute.xlu0 %380
    %v383 = vadd.f32 %v373, %v381
    %v384 = vtanh.pop %v383
    %386 = vrot.lane.b32.xlu0 %v384, 64
    %v387 = vpop.permute.xlu0 %386
    %v389 = vmul.f32 %v368, %v387
    %391 = vrot.lane.b32.xlu0 %v389, 32
    %v392 = vpop.permute.xlu0 %391
    %vm394 = vcmask 257026
    %395 = vst.msk [vmem:[#allocation2] sm:$0xc] %vm394, %v392
    %v396 = vrot.slane %v389, 2
    %397 = vrot.lane.b32.xlu0 %v396, 32
    %v398 = vpop.permute.xlu0 %397
    %v399 = vsel %vm182, %v398, 0
    %401 = vmatprep.subr.mxu0 0.0
    %402 = vmatpush1.msra.mxu0 0.0
    %403 = vmatprep.subr.mxu0 0.0
    %404 = vmatpush1.msra.mxu0 0.0
    %405 = vmatprep.subr.mxu0 0.0
    %406 = vmatpush1.msra.mxu0 0.0
    %407 = vmatprep.subr.mxu0 0.0
    %408 = vmatpush1.msra.mxu0 0.0
    %409 = vmatprep.subr.mxu0 0.0
    %410 = vmatpush1.msra.mxu0 0.0
    %411 = vmatprep.subr.mxu0 0.0
    %412 = vmatpush1.msra.mxu0 0.0
    %413 = vmatprep.subr.mxu0 0.0
    %414 = vmatpush1.msra.mxu0 0.0
    %415 = vmatprep.subr.mxu0 0.0
    %416 = vmatpush1.msra.mxu0 0.0
    %417 = vmatprep.subr.mxu0 0.0
    %418 = vmatpush1.msra.mxu0 0.0
    %419 = vmatprep.subr.mxu0 0.0
    %420 = vmatpush1.msra.mxu0 0.0
    %421 = vmatprep.subr.mxu0 0.0
    %422 = vmatpush1.msra.mxu0 0.0
    %423 = vmatprep.subr.mxu0 0.0
    %424 = vmatpush1.msra.mxu0 0.0
    %425 = vmatprep.subr.mxu0 0.0
    %426 = vmatpush1.msra.mxu0 %v88
    %427 = vmatprep.subr.mxu0 0.0
    %428 = vmatpush1.msra.mxu0 %v87
    %429 = vmatprep.subr.mxu0 0.0
    %430 = vmatpush1.msra.mxu0 %v86
    %431 = vmatprep.subr.mxu0 0.0
    %432 = vmatpush1.msra.mxu0 %v85
    %433 = vmatprep.subr.mxu0 0.0
    %434 = vmatpush2.msra.mxu0 0.0
    %435 = vmatprep.subr.mxu0 0.0
    %436 = vmatpush2.msra.mxu0 0.0
    %437 = vmatprep.subr.mxu0 0.0
    %438 = vmatpush2.msra.mxu0 0.0
    %439 = vmatprep.subr.mxu0 0.0
    %440 = vmatpush2.msra.mxu0 0.0
    %441 = vmatprep.subr.mxu0 0.0
    %442 = vmatpush2.msra.mxu0 0.0
    %443 = vmatprep.subr.mxu0 0.0
    %444 = vmatpush2.msra.mxu0 0.0
    %445 = vmatprep.subr.mxu0 0.0
    %446 = vmatpush2.msra.mxu0 0.0
    %447 = vmatprep.subr.mxu0 0.0
    %448 = vmatpush2.msra.mxu0 0.0
    %449 = vmatprep.subr.mxu0 0.0
    %450 = vmatpush2.msra.mxu0 0.0
    %451 = vmatprep.subr.mxu0 0.0
    %452 = vmatpush2.msra.mxu0 0.0
    %453 = vmatprep.subr.mxu0 0.0
    %454 = vmatpush2.msra.mxu0 0.0
    %455 = vmatprep.subr.mxu0 0.0
    %456 = vmatpush2.msra.mxu0 0.0
    %457 = vmatprep.subr.mxu0 0.0
    %458 = vmatpush2.msra.mxu0 0.0
    %459 = vmatprep.subr.mxu0 0.0
    %460 = vmatpush2.msra.mxu0 0.0
    %461 = vmatprep.subr.mxu0 0.0
    %462 = vmatpush2.msra.mxu0 0.0
    %463 = vmatprep.subr.mxu0 0.0
    %464 = vmatpush2.msra.mxu0 0.0
    %465 = vmatprep.mubr.f32.mxu0 0.0
    %466 = vmatmul.mubr.f32.gmra.mxu0 %v399
    %v467 = vpop.f32.mrf.mxu0
    %v468 = vadd.f32 0.0, %v467
    %v469 = vpop.f32.mrf.mxu0
    %470 = vdwg.mxu0
    %v472 = vrot.slane %v468, 4
    %v474 = vadd.f32 %v174, %v472
    %v475 = vxor.u32 %v474, 2147483648
    %v476 = vmul.f32 %v475, 1.442695
    %v477 = vpow.pop %v476
    %v478 = vadd.f32 %v477, 1.0
    %v479 = vrcp.pop %v478
    %v480 = vmul.f32 1.0, %v479
    %v481 = vtanh.pop %v474
    %v483 = vrot.slane %v383, 6
    %v485 = vmul.f32 %v480, %v483
    %487 = vrot.lane.b32.xlu0 %v481, 64
    %v488 = vpop.permute.xlu0 %487
    %v490 = vmul.f32 %v480, %v488
    %492 = vrot.lane.b32.xlu0 %v490, 32
    %v493 = vpop.permute.xlu0 %492
    %v495 = vadd.f32 %v485, %v493
    %v496 = vtanh.pop %v495
    %498 = vrot.lane.b32.xlu0 %v496, 64
    %v499 = vpop.permute.xlu0 %498
    %v501 = vmul.f32 %v480, %v499
    %503 = vrot.lane.b32.xlu0 %v501, 32
    %v504 = vpop.permute.xlu0 %503
    %vm506 = vcmask 259076
    %507 = vst.msk [vmem:[#allocation2] sm:$0x30] %vm506, %v504
    %v508 = vrot.slane %v501, 4
    %509 = vrot.lane.b32.xlu0 %v508, 32
    %v510 = vpop.permute.xlu0 %509
    %v511 = vsel %vm182, %v510, 0
    %513 = vmatprep.subr.mxu0 0.0
    %514 = vmatpush1.msra.mxu0 0.0
    %515 = vmatprep.subr.mxu0 0.0
    %516 = vmatpush1.msra.mxu0 0.0
    %517 = vmatprep.subr.mxu0 0.0
    %518 = vmatpush1.msra.mxu0 0.0
    %519 = vmatprep.subr.mxu0 0.0
    %520 = vmatpush1.msra.mxu0 0.0
    %521 = vmatprep.subr.mxu0 0.0
    %522 = vmatpush1.msra.mxu0 0.0
    %523 = vmatprep.subr.mxu0 0.0
    %524 = vmatpush1.msra.mxu0 0.0
    %525 = vmatprep.subr.mxu0 0.0
    %526 = vmatpush1.msra.mxu0 0.0
    %527 = vmatprep.subr.mxu0 0.0
    %528 = vmatpush1.msra.mxu0 0.0
    %529 = vmatprep.subr.mxu0 0.0
    %530 = vmatpush1.msra.mxu0 0.0
    %531 = vmatprep.subr.mxu0 0.0
    %532 = vmatpush1.msra.mxu0 0.0
    %533 = vmatprep.subr.mxu0 0.0
    %534 = vmatpush1.msra.mxu0 0.0
    %535 = vmatprep.subr.mxu0 0.0
    %536 = vmatpush1.msra.mxu0 0.0
    %537 = vmatprep.subr.mxu0 0.0
    %538 = vmatpush1.msra.mxu0 %v88
    %539 = vmatprep.subr.mxu0 0.0
    %540 = vmatpush1.msra.mxu0 %v87
    %541 = vmatprep.subr.mxu0 0.0
    %542 = vmatpush1.msra.mxu0 %v86
    %543 = vmatprep.subr.mxu0 0.0
    %544 = vmatpush1.msra.mxu0 %v85
    %545 = vmatprep.subr.mxu0 0.0
    %546 = vmatpush2.msra.mxu0 0.0
    %547 = vmatprep.subr.mxu0 0.0
    %548 = vmatpush2.msra.mxu0 0.0
    %549 = vmatprep.subr.mxu0 0.0
    %550 = vmatpush2.msra.mxu0 0.0
    %551 = vmatprep.subr.mxu0 0.0
    %552 = vmatpush2.msra.mxu0 0.0
    %553 = vmatprep.subr.mxu0 0.0
    %554 = vmatpush2.msra.mxu0 0.0
    %555 = vmatprep.subr.mxu0 0.0
    %556 = vmatpush2.msra.mxu0 0.0
    %557 = vmatprep.subr.mxu0 0.0
    %558 = vmatpush2.msra.mxu0 0.0
    %559 = vmatprep.subr.mxu0 0.0
    %560 = vmatpush2.msra.mxu0 0.0
    %561 = vmatprep.subr.mxu0 0.0
    %562 = vmatpush2.msra.mxu0 0.0
    %563 = vmatprep.subr.mxu0 0.0
    %564 = vmatpush2.msra.mxu0 0.0
    %565 = vmatprep.subr.mxu0 0.0
    %566 = vmatpush2.msra.mxu0 0.0
    %567 = vmatprep.subr.mxu0 0.0
    %568 = vmatpush2.msra.mxu0 0.0
    %569 = vmatprep.subr.mxu0 0.0
    %570 = vmatpush2.msra.mxu0 0.0
    %571 = vmatprep.subr.mxu0 0.0
    %572 = vmatpush2.msra.mxu0 0.0
    %573 = vmatprep.subr.mxu0 0.0
    %574 = vmatpush2.msra.mxu0 0.0
    %575 = vmatprep.subr.mxu0 0.0
    %576 = vmatpush2.msra.mxu0 0.0
    %577 = vmatprep.mubr.f32.mxu0 0.0
    %578 = vmatmul.mubr.f32.gmra.mxu0 %v511
    %v579 = vpop.f32.mrf.mxu0
    %v580 = vadd.f32 0.0, %v579
    %v581 = vpop.f32.mrf.mxu0
    %582 = vdwg.mxu0
    %v584 = vrot.slane %v580, 2
    %v586 = vadd.f32 %v174, %v584
    %v587 = vxor.u32 %v586, 2147483648
    %v588 = vmul.f32 %v587, 1.442695
    %v589 = vpow.pop %v588
    %v590 = vadd.f32 %v589, 1.0
    %v591 = vrcp.pop %v590
    %v592 = vmul.f32 1.0, %v591
    %v593 = vtanh.pop %v586
    %v595 = vrot.slane %v495, 6
    %v597 = vmul.f32 %v592, %v595
    %599 = vrot.lane.b32.xlu0 %v593, 64
    %v600 = vpop.permute.xlu0 %599
    %v602 = vmul.f32 %v592, %v600
    %604 = vrot.lane.b32.xlu0 %v602, 32
    %v605 = vpop.permute.xlu0 %604
    %v607 = vadd.f32 %v597, %v605
    %v608 = vtanh.pop %v607
    %610 = vrot.lane.b32.xlu0 %v608, 64
    %v611 = vpop.permute.xlu0 %610
    %v613 = vmul.f32 %v592, %v611
    %615 = vrot.lane.b32.xlu0 %v613, 32
    %v616 = vpop.permute.xlu0 %615
    %vm618 = vcmask 261126
    %619 = vst.msk [vmem:[#allocation2] sm:$0xc0] %vm618, %v616
    %v620 = vrot.slane %v613, 6
    %621 = vrot.lane.b32.xlu0 %v620, 32
    %v622 = vpop.permute.xlu0 %621
    %v623 = vsel %vm182, %v622, 0
    %625 = vmatprep.subr.mxu0 0.0
    %626 = vmatpush1.msra.mxu0 0.0
    %627 = vmatprep.subr.mxu0 0.0
    %628 = vmatpush1.msra.mxu0 0.0
    %629 = vmatprep.subr.mxu0 0.0
    %630 = vmatpush1.msra.mxu0 0.0
    %631 = vmatprep.subr.mxu0 0.0
    %632 = vmatpush1.msra.mxu0 0.0
    %633 = vmatprep.subr.mxu0 0.0
    %634 = vmatpush1.msra.mxu0 0.0
    %635 = vmatprep.subr.mxu0 0.0
    %636 = vmatpush1.msra.mxu0 0.0
    %637 = vmatprep.subr.mxu0 0.0
    %638 = vmatpush1.msra.mxu0 0.0
    %639 = vmatprep.subr.mxu0 0.0
    %640 = vmatpush1.msra.mxu0 0.0
    %641 = vmatprep.subr.mxu0 0.0
    %642 = vmatpush1.msra.mxu0 0.0
    %643 = vmatprep.subr.mxu0 0.0
    %644 = vmatpush1.msra.mxu0 0.0
    %645 = vmatprep.subr.mxu0 0.0
    %646 = vmatpush1.msra.mxu0 0.0
    %647 = vmatprep.subr.mxu0 0.0
    %648 = vmatpush1.msra.mxu0 0.0
    %649 = vmatprep.subr.mxu0 0.0
    %650 = vmatpush1.msra.mxu0 %v88
    %651 = vmatprep.subr.mxu0 0.0
    %652 = vmatpush1.msra.mxu0 %v87
    %653 = vmatprep.subr.mxu0 0.0
    %654 = vmatpush1.msra.mxu0 %v86
    %655 = vmatprep.subr.mxu0 0.0
    %656 = vmatpush1.msra.mxu0 %v85
    %657 = vmatprep.subr.mxu0 0.0
    %658 = vmatpush2.msra.mxu0 0.0
    %659 = vmatprep.subr.mxu0 0.0
    %660 = vmatpush2.msra.mxu0 0.0
    %661 = vmatprep.subr.mxu0 0.0
    %662 = vmatpush2.msra.mxu0 0.0
    %663 = vmatprep.subr.mxu0 0.0
    %664 = vmatpush2.msra.mxu0 0.0
    %665 = vmatprep.subr.mxu0 0.0
    %666 = vmatpush2.msra.mxu0 0.0
    %667 = vmatprep.subr.mxu0 0.0
    %668 = vmatpush2.msra.mxu0 0.0
    %669 = vmatprep.subr.mxu0 0.0
    %670 = vmatpush2.msra.mxu0 0.0
    %671 = vmatprep.subr.mxu0 0.0
    %672 = vmatpush2.msra.mxu0 0.0
    %673 = vmatprep.subr.mxu0 0.0
    %674 = vmatpush2.msra.mxu0 0.0
    %675 = vmatprep.subr.mxu0 0.0
    %676 = vmatpush2.msra.mxu0 0.0
    %677 = vmatprep.subr.mxu0 0.0
    %678 = vmatpush2.msra.mxu0 0.0
    %679 = vmatprep.subr.mxu0 0.0
    %680 = vmatpush2.msra.mxu0 0.0
    %681 = vmatprep.subr.mxu0 0.0
    %682 = vmatpush2.msra.mxu0 0.0
    %683 = vmatprep.subr.mxu0 0.0
    %684 = vmatpush2.msra.mxu0 0.0
    %685 = vmatprep.subr.mxu0 0.0
    %686 = vmatpush2.msra.mxu0 0.0
    %687 = vmatprep.subr.mxu0 0.0
    %688 = vmatpush2.msra.mxu0 0.0
    %689 = vmatprep.mubr.f32.mxu0 0.0
    %690 = vmatmul.mubr.f32.gmra.mxu0 %v623
    %v691 = vpop.f32.mrf.mxu0
    %v692 = vadd.f32 0.0, %v691
    %v693 = vpop.f32.mrf.mxu0
    %694 = vdwg.mxu0
    %v695 = vadd.f32 %v179, %v692
    %v696 = vxor.u32 %v695, 2147483648
    %v697 = vmul.f32 %v696, 1.442695
    %v698 = vpow.pop %v697
    %v699 = vadd.f32 %v698, 1.0
    %v700 = vrcp.pop %v699
    %v701 = vmul.f32 1.0, %v700
    %v702 = vtanh.pop %v695
    %v704 = vrot.slane %v607, 6
    %v706 = vmul.f32 %v701, %v704
    %708 = vrot.lane.b32.xlu0 %v702, 64
    %v709 = vpop.permute.xlu0 %708
    %v711 = vmul.f32 %v701, %v709
    %713 = vrot.lane.b32.xlu0 %v711, 32
    %v714 = vpop.permute.xlu0 %713
    %v716 = vadd.f32 %v706, %v714
    %v717 = vtanh.pop %v716
    %719 = vrot.lane.b32.xlu0 %v717, 64
    %v720 = vpop.permute.xlu0 %719
    %v722 = vmul.f32 %v701, %v720
    %724 = vrot.lane.b32.xlu0 %v722, 32
    %v725 = vpop.permute.xlu0 %724
    %727 = vst.msk [vmem:[#allocation2 + $0x8] sm:$0x3] %vm285, %v725
    %v728 = vsel %vm182, %v725, 0
    %730 = vmatprep.subr.mxu0 0.0
    %731 = vmatpush1.msra.mxu0 0.0
    %732 = vmatprep.subr.mxu0 0.0
    %733 = vmatpush1.msra.mxu0 0.0
    %734 = vmatprep.subr.mxu0 0.0
    %735 = vmatpush1.msra.mxu0 0.0
    %736 = vmatprep.subr.mxu0 0.0
    %737 = vmatpush1.msra.mxu0 0.0
    %738 = vmatprep.subr.mxu0 0.0
    %739 = vmatpush1.msra.mxu0 0.0
    %740 = vmatprep.subr.mxu0 0.0
    %741 = vmatpush1.msra.mxu0 0.0
    %742 = vmatprep.subr.mxu0 0.0
    %743 = vmatpush1.msra.mxu0 0.0
    %744 = vmatprep.subr.mxu0 0.0
    %745 = vmatpush1.msra.mxu0 0.0
    %746 = vmatprep.subr.mxu0 0.0
    %747 = vmatpush1.msra.mxu0 0.0
    %748 = vmatprep.subr.mxu0 0.0
    %749 = vmatpush1.msra.mxu0 0.0
    %750 = vmatprep.subr.mxu0 0.0
    %751 = vmatpush1.msra.mxu0 0.0
    %752 = vmatprep.subr.mxu0 0.0
    %753 = vmatpush1.msra.mxu0 0.0
    %754 = vmatprep.subr.mxu0 0.0
    %755 = vmatpush1.msra.mxu0 %v88
    %756 = vmatprep.subr.mxu0 0.0
    %757 = vmatpush1.msra.mxu0 %v87
    %758 = vmatprep.subr.mxu0 0.0
    %759 = vmatpush1.msra.mxu0 %v86
    %760 = vmatprep.subr.mxu0 0.0
    %761 = vmatpush1.msra.mxu0 %v85
    %762 = vmatprep.subr.mxu0 0.0
    %763 = vmatpush2.msra.mxu0 0.0
    %764 = vmatprep.subr.mxu0 0.0
    %765 = vmatpush2.msra.mxu0 0.0
    %766 = vmatprep.subr.mxu0 0.0
    %767 = vmatpush2.msra.mxu0 0.0
    %768 = vmatprep.subr.mxu0 0.0
    %769 = vmatpush2.msra.mxu0 0.0
    %770 = vmatprep.subr.mxu0 0.0
    %771 = vmatpush2.msra.mxu0 0.0
    %772 = vmatprep.subr.mxu0 0.0
    %773 = vmatpush2.msra.mxu0 0.0
    %774 = vmatprep.subr.mxu0 0.0
    %775 = vmatpush2.msra.mxu0 0.0
    %776 = vmatprep.subr.mxu0 0.0
    %777 = vmatpush2.msra.mxu0 0.0
    %778 = vmatprep.subr.mxu0 0.0
    %779 = vmatpush2.msra.mxu0 0.0
    %780 = vmatprep.subr.mxu0 0.0
    %781 = vmatpush2.msra.mxu0 0.0
    %782 = vmatprep.subr.mxu0 0.0
    %783 = vmatpush2.msra.mxu0 0.0
    %784 = vmatprep.subr.mxu0 0.0
    %785 = vmatpush2.msra.mxu0 0.0
    %786 = vmatprep.subr.mxu0 0.0
    %787 = vmatpush2.msra.mxu0 0.0
    %788 = vmatprep.subr.mxu0 0.0
    %789 = vmatpush2.msra.mxu0 0.0
    %790 = vmatprep.subr.mxu0 0.0
    %791 = vmatpush2.msra.mxu0 0.0
    %792 = vmatprep.subr.mxu0 0.0
    %793 = vmatpush2.msra.mxu0 0.0
    %794 = vmatprep.mubr.f32.mxu0 0.0
    %795 = vmatmul.mubr.f32.gmra.mxu0 %v728
    %v796 = vpop.f32.mrf.mxu0
    %v797 = vadd.f32 0.0, %v796
    %v798 = vpop.f32.mrf.mxu0
    %799 = vdwg.mxu0
    %v801 = vrot.slane %v797, 6
    %v803 = vadd.f32 %v179, %v801
    %v804 = vxor.u32 %v803, 2147483648
    %v805 = vmul.f32 %v804, 1.442695
    %v806 = vpow.pop %v805
    %v807 = vadd.f32 %v806, 1.0
    %v808 = vrcp.pop %v807
    %v809 = vmul.f32 1.0, %v808
    %v810 = vtanh.pop %v803
    %v812 = vrot.slane %v716, 6
    %v814 = vmul.f32 %v809, %v812
    %816 = vrot.lane.b32.xlu0 %v810, 64
    %v817 = vpop.permute.xlu0 %816
    %v819 = vmul.f32 %v809, %v817
    %821 = vrot.lane.b32.xlu0 %v819, 32
    %v822 = vpop.permute.xlu0 %821
    %v824 = vadd.f32 %v814, %v822
    %v825 = vtanh.pop %v824
    %827 = vrot.lane.b32.xlu0 %v825, 64
    %v828 = vpop.permute.xlu0 %827
    %v830 = vmul.f32 %v809, %v828
    %832 = vrot.lane.b32.xlu0 %v830, 32
    %v833 = vpop.permute.xlu0 %832
    %835 = vst.msk [vmem:[#allocation2 + $0x8] sm:$0xc] %vm394, %v833
    %v836 = vrot.slane %v830, 2
    %837 = vrot.lane.b32.xlu0 %v836, 32
    %v838 = vpop.permute.xlu0 %837
    %v839 = vsel %vm182, %v838, 0
    %841 = vmatprep.subr.mxu0 0.0
    %842 = vmatpush1.msra.mxu0 0.0
    %843 = vmatprep.subr.mxu0 0.0
    %844 = vmatpush1.msra.mxu0 0.0
    %845 = vmatprep.subr.mxu0 0.0
    %846 = vmatpush1.msra.mxu0 0.0
    %847 = vmatprep.subr.mxu0 0.0
    %848 = vmatpush1.msra.mxu0 0.0
    %849 = vmatprep.subr.mxu0 0.0
    %850 = vmatpush1.msra.mxu0 0.0
    %851 = vmatprep.subr.mxu0 0.0
    %852 = vmatpush1.msra.mxu0 0.0
    %853 = vmatprep.subr.mxu0 0.0
    %854 = vmatpush1.msra.mxu0 0.0
    %855 = vmatprep.subr.mxu0 0.0
    %856 = vmatpush1.msra.mxu0 0.0
    %857 = vmatprep.subr.mxu0 0.0
    %858 = vmatpush1.msra.mxu0 0.0
    %859 = vmatprep.subr.mxu0 0.0
    %860 = vmatpush1.msra.mxu0 0.0
    %861 = vmatprep.subr.mxu0 0.0
    %862 = vmatpush1.msra.mxu0 0.0
    %863 = vmatprep.subr.mxu0 0.0
    %864 = vmatpush1.msra.mxu0 0.0
    %865 = vmatprep.subr.mxu0 0.0
    %866 = vmatpush1.msra.mxu0 %v88
    %867 = vmatprep.subr.mxu0 0.0
    %868 = vmatpush1.msra.mxu0 %v87
    %869 = vmatprep.subr.mxu0 0.0
    %870 = vmatpush1.msra.mxu0 %v86
    %871 = vmatprep.subr.mxu0 0.0
    %872 = vmatpush1.msra.mxu0 %v85
    %873 = vmatprep.subr.mxu0 0.0
    %874 = vmatpush2.msra.mxu0 0.0
    %875 = vmatprep.subr.mxu0 0.0
    %876 = vmatpush2.msra.mxu0 0.0
    %877 = vmatprep.subr.mxu0 0.0
    %878 = vmatpush2.msra.mxu0 0.0
    %879 = vmatprep.subr.mxu0 0.0
    %880 = vmatpush2.msra.mxu0 0.0
    %881 = vmatprep.subr.mxu0 0.0
    %882 = vmatpush2.msra.mxu0 0.0
    %883 = vmatprep.subr.mxu0 0.0
    %884 = vmatpush2.msra.mxu0 0.0
    %885 = vmatprep.subr.mxu0 0.0
    %886 = vmatpush2.msra.mxu0 0.0
    %887 = vmatprep.subr.mxu0 0.0
    %888 = vmatpush2.msra.mxu0 0.0
    %889 = vmatprep.subr.mxu0 0.0
    %890 = vmatpush2.msra.mxu0 0.0
    %891 = vmatprep.subr.mxu0 0.0
    %892 = vmatpush2.msra.mxu0 0.0
    %893 = vmatprep.subr.mxu0 0.0
    %894 = vmatpush2.msra.mxu0 0.0
    %895 = vmatprep.subr.mxu0 0.0
    %896 = vmatpush2.msra.mxu0 0.0
    %897 = vmatprep.subr.mxu0 0.0
    %898 = vmatpush2.msra.mxu0 0.0
    %899 = vmatprep.subr.mxu0 0.0
    %900 = vmatpush2.msra.mxu0 0.0
    %901 = vmatprep.subr.mxu0 0.0
    %902 = vmatpush2.msra.mxu0 0.0
    %903 = vmatprep.subr.mxu0 0.0
    %904 = vmatpush2.msra.mxu0 0.0
    %905 = vmatprep.mubr.f32.mxu0 0.0
    %906 = vmatmul.mubr.f32.gmra.mxu0 %v839
    %v907 = vpop.f32.mrf.mxu0
    %v908 = vadd.f32 0.0, %v907
    %v909 = vpop.f32.mrf.mxu0
    %910 = vdwg.mxu0
    %v912 = vrot.slane %v908, 4
    %v914 = vadd.f32 %v179, %v912
    %v915 = vxor.u32 %v914, 2147483648
    %v916 = vmul.f32 %v915, 1.442695
    %v917 = vpow.pop %v916
    %v918 = vadd.f32 %v917, 1.0
    %v919 = vrcp.pop %v918
    %v920 = vmul.f32 1.0, %v919
    %v921 = vtanh.pop %v914
    %v923 = vrot.slane %v824, 6
    %v925 = vmul.f32 %v920, %v923
    %927 = vrot.lane.b32.xlu0 %v921, 64
    %v928 = vpop.permute.xlu0 %927
    %v930 = vmul.f32 %v920, %v928
    %932 = vrot.lane.b32.xlu0 %v930, 32
    %v933 = vpop.permute.xlu0 %932
    %v935 = vadd.f32 %v925, %v933
    %v936 = vtanh.pop %v935
    %938 = vrot.lane.b32.xlu0 %v936, 64
    %v939 = vpop.permute.xlu0 %938
    %v941 = vmul.f32 %v920, %v939
    %943 = vrot.lane.b32.xlu0 %v941, 32
    %v944 = vpop.permute.xlu0 %943
    %946 = vst.msk [vmem:[#allocation2 + $0x8] sm:$0x30] %vm506, %v944
    %v947 = vrot.slane %v941, 4
    %948 = vrot.lane.b32.xlu0 %v947, 32
    %v949 = vpop.permute.xlu0 %948
    %v950 = vsel %vm182, %v949, 0
    %952 = vmatprep.subr.mxu0 0.0
    %953 = vmatpush1.msra.mxu0 0.0
    %954 = vmatprep.subr.mxu0 0.0
    %955 = vmatpush1.msra.mxu0 0.0
    %956 = vmatprep.subr.mxu0 0.0
    %957 = vmatpush1.msra.mxu0 0.0
    %958 = vmatprep.subr.mxu0 0.0
    %959 = vmatpush1.msra.mxu0 0.0
    %960 = vmatprep.subr.mxu0 0.0
    %961 = vmatpush1.msra.mxu0 0.0
    %962 = vmatprep.subr.mxu0 0.0
    %963 = vmatpush1.msra.mxu0 0.0
    %964 = vmatprep.subr.mxu0 0.0
    %965 = vmatpush1.msra.mxu0 0.0
    %966 = vmatprep.subr.mxu0 0.0
    %967 = vmatpush1.msra.mxu0 0.0
    %968 = vmatprep.subr.mxu0 0.0
    %969 = vmatpush1.msra.mxu0 0.0
    %970 = vmatprep.subr.mxu0 0.0
    %971 = vmatpush1.msra.mxu0 0.0
    %972 = vmatprep.subr.mxu0 0.0
    %973 = vmatpush1.msra.mxu0 0.0
    %974 = vmatprep.subr.mxu0 0.0
    %975 = vmatpush1.msra.mxu0 0.0
    %976 = vmatprep.subr.mxu0 0.0
    %977 = vmatpush1.msra.mxu0 %v88
    %978 = vmatprep.subr.mxu0 0.0
    %979 = vmatpush1.msra.mxu0 %v87
    %980 = vmatprep.subr.mxu0 0.0
    %981 = vmatpush1.msra.mxu0 %v86
    %982 = vmatprep.subr.mxu0 0.0
    %983 = vmatpush1.msra.mxu0 %v85
    %984 = vmatprep.subr.mxu0 0.0
    %985 = vmatpush2.msra.mxu0 0.0
    %986 = vmatprep.subr.mxu0 0.0
    %987 = vmatpush2.msra.mxu0 0.0
    %988 = vmatprep.subr.mxu0 0.0
    %989 = vmatpush2.msra.mxu0 0.0
    %990 = vmatprep.subr.mxu0 0.0
    %991 = vmatpush2.msra.mxu0 0.0
    %992 = vmatprep.subr.mxu0 0.0
    %993 = vmatpush2.msra.mxu0 0.0
    %994 = vmatprep.subr.mxu0 0.0
    %995 = vmatpush2.msra.mxu0 0.0
    %996 = vmatprep.subr.mxu0 0.0
    %997 = vmatpush2.msra.mxu0 0.0
    %998 = vmatprep.subr.mxu0 0.0
    %999 = vmatpush2.msra.mxu0 0.0
    %1000 = vmatprep.subr.mxu0 0.0
    %1001 = vmatpush2.msra.mxu0 0.0
    %1002 = vmatprep.subr.mxu0 0.0
    %1003 = vmatpush2.msra.mxu0 0.0
    %1004 = vmatprep.subr.mxu0 0.0
    %1005 = vmatpush2.msra.mxu0 0.0
    %1006 = vmatprep.subr.mxu0 0.0
    %1007 = vmatpush2.msra.mxu0 0.0
    %1008 = vmatprep.subr.mxu0 0.0
    %1009 = vmatpush2.msra.mxu0 0.0
    %1010 = vmatprep.subr.mxu0 0.0
    %1011 = vmatpush2.msra.mxu0 0.0
    %1012 = vmatprep.subr.mxu0 0.0
    %1013 = vmatpush2.msra.mxu0 0.0
    %1014 = vmatprep.subr.mxu0 0.0
    %1015 = vmatpush2.msra.mxu0 0.0
    %1016 = vmatprep.mubr.f32.mxu0 0.0
    %1017 = vmatmul.mubr.f32.gmra.mxu0 %v950
    %v1018 = vpop.f32.mrf.mxu0
    %v1019 = vadd.f32 0.0, %v1018
    %v1020 = vpop.f32.mrf.mxu0
    %1021 = vdwg.mxu0
    %v1023 = vrot.slane %v1019, 2
    %v1025 = vadd.f32 %v179, %v1023
    %v1026 = vxor.u32 %v1025, 2147483648
    %v1027 = vmul.f32 %v1026, 1.442695
    %v1028 = vpow.pop %v1027
    %v1029 = vadd.f32 %v1028, 1.0
    %v1030 = vrcp.pop %v1029
    %v1031 = vmul.f32 1.0, %v1030
    %v1032 = vtanh.pop %v1025
    %v1034 = vrot.slane %v935, 6
    %v1036 = vmul.f32 %v1031, %v1034
    %1038 = vrot.lane.b32.xlu0 %v1032, 64
    %v1039 = vpop.permute.xlu0 %1038
    %v1041 = vmul.f32 %v1031, %v1039
    %1043 = vrot.lane.b32.xlu0 %v1041, 32
    %v1044 = vpop.permute.xlu0 %1043
    %v1046 = vadd.f32 %v1036, %v1044
    %v1047 = vtanh.pop %v1046
    %1049 = vrot.lane.b32.xlu0 %v1047, 64
    %v1050 = vpop.permute.xlu0 %1049
    %v1052 = vmul.f32 %v1031, %v1050
    %1054 = vrot.lane.b32.xlu0 %v1052, 32
    %v1055 = vpop.permute.xlu0 %1054
    %1057 = vst.msk [vmem:[#allocation2 + $0x8] sm:$0xc0] %vm618, %v1055
    %v1058 = vld [vmem:[#allocation2] sm:$0xff]
    %v1059 = vld [vmem:[#allocation2 + $0x8] sm:$0xff]
    %v1060 = vld [vmem:[%s4] sm:$0xff]
    %v1061 = vld [vmem:[%s4 + $0x8] sm:$0xff]
    %v1062 = vld [vmem:[%s4 + $0x10] sm:$0xff]
    %v1063 = vld [vmem:[%s4 + $0x18] sm:$0xff]
    %v1064 = vld [vmem:[#allocation9] sm:$0xff]
    %v1065 = vld [vmem:[#allocation9 + $0x8] sm:$0xff]
    %v1066 = vld [vmem:[#allocation9 + $0x10] sm:$0xff]
    %v1067 = vld [vmem:[#allocation9 + $0x18] sm:$0xff]
    %v1068 = vld [vmem:[#allocation10] sm:$0x1]
    %v1070 = vlaneseq
    %v1071 = vshrl.u32 %v1070, 7
    %v1072 = vsub.s32 0, %v1071
    %v1073 = vrot.slane %v1068, %v1072
    %v1076 = vsel %vm182, %v1058, 0
    %v1079 = vsel %vm182, %v1059, 0
    %1081 = vmatprep.subr.mxu0 0.0
    %1082 = vmatpush1.msra.mxu0 0.0
    %1083 = vmatprep.subr.mxu0 0.0
    %1084 = vmatpush1.msra.mxu0 0.0
    %1085 = vmatprep.subr.mxu0 0.0
    %1086 = vmatpush1.msra.mxu0 0.0
    %1087 = vmatprep.subr.mxu0 0.0
    %1088 = vmatpush1.msra.mxu0 0.0
    %1089 = vmatprep.subr.mxu0 0.0
    %1090 = vmatpush1.msra.mxu0 0.0
    %1091 = vmatprep.subr.mxu0 0.0
    %1092 = vmatpush1.msra.mxu0 0.0
    %1093 = vmatprep.subr.mxu0 0.0
    %1094 = vmatpush1.msra.mxu0 0.0
    %1095 = vmatprep.subr.mxu0 0.0
    %1096 = vmatpush1.msra.mxu0 0.0
    %1097 = vmatprep.subr.mxu0 0.0
    %1098 = vmatpush1.msra.mxu0 0.0
    %1099 = vmatprep.subr.mxu0 0.0
    %1100 = vmatpush1.msra.mxu0 0.0
    %1101 = vmatprep.subr.mxu0 0.0
    %1102 = vmatpush1.msra.mxu0 0.0
    %1103 = vmatprep.subr.mxu0 0.0
    %1104 = vmatpush1.msra.mxu0 0.0
    %1105 = vmatprep.subr.mxu0 0.0
    %1106 = vmatpush1.msra.mxu0 %v1063
    %1107 = vmatprep.subr.mxu0 0.0
    %1108 = vmatpush1.msra.mxu0 %v1062
    %1109 = vmatprep.subr.mxu0 0.0
    %1110 = vmatpush1.msra.mxu0 %v1061
    %1111 = vmatprep.subr.mxu0 0.0
    %1112 = vmatpush1.msra.mxu0 %v1060
    %1113 = vmatprep.subr.mxu0 0.0
    %1114 = vmatpush2.msra.mxu0 0.0
    %1115 = vmatprep.subr.mxu0 0.0
    %1116 = vmatpush2.msra.mxu0 0.0
    %1117 = vmatprep.subr.mxu0 0.0
    %1118 = vmatpush2.msra.mxu0 0.0
    %1119 = vmatprep.subr.mxu0 0.0
    %1120 = vmatpush2.msra.mxu0 0.0
    %1121 = vmatprep.subr.mxu0 0.0
    %1122 = vmatpush2.msra.mxu0 0.0
    %1123 = vmatprep.subr.mxu0 0.0
    %1124 = vmatpush2.msra.mxu0 0.0
    %1125 = vmatprep.subr.mxu0 0.0
    %1126 = vmatpush2.msra.mxu0 0.0
    %1127 = vmatprep.subr.mxu0 0.0
    %1128 = vmatpush2.msra.mxu0 0.0
    %1129 = vmatprep.subr.mxu0 0.0
    %1130 = vmatpush2.msra.mxu0 0.0
    %1131 = vmatprep.subr.mxu0 0.0
    %1132 = vmatpush2.msra.mxu0 0.0
    %1133 = vmatprep.subr.mxu0 0.0
    %1134 = vmatpush2.msra.mxu0 0.0
    %1135 = vmatprep.subr.mxu0 0.0
    %1136 = vmatpush2.msra.mxu0 0.0
    %1137 = vmatprep.subr.mxu0 0.0
    %1138 = vmatpush2.msra.mxu0 0.0
    %1139 = vmatprep.subr.mxu0 0.0
    %1140 = vmatpush2.msra.mxu0 0.0
    %1141 = vmatprep.subr.mxu0 0.0
    %1142 = vmatpush2.msra.mxu0 0.0
    %1143 = vmatprep.subr.mxu0 0.0
    %1144 = vmatpush2.msra.mxu0 0.0
    %1145 = vmatprep.mubr.f32.mxu0 0.0
    %1146 = vmatmul.mubr.f32.gmra.mxu0 %v1076
    %v1147 = vpop.f32.mrf.mxu0
    %v1148 = vadd.f32 %v1073, %v1147
    %v1149 = vpop.f32.mrf.mxu0
    %1150 = vmatprep.mubr.f32.mxu0 0.0
    %1151 = vmatmul.mubr.f32.gmra.mxu0 %v1079
    %v1152 = vpop.f32.mrf.mxu0
    %v1153 = vadd.f32 %v1073, %v1152
    %v1154 = vpop.f32.mrf.mxu0
    %1155 = vdwg.mxu0
    %1156 = vmatprep.subr.mxu0 0.0
    %1157 = vmatpush1.msra.mxu0 0.0
    %1158 = vmatprep.subr.mxu0 0.0
    %1159 = vmatpush1.msra.mxu0 0.0
    %1160 = vmatprep.subr.mxu0 0.0
    %1161 = vmatpush1.msra.mxu0 0.0
    %1162 = vmatprep.subr.mxu0 0.0
    %1163 = vmatpush1.msra.mxu0 0.0
    %1164 = vmatprep.subr.mxu0 0.0
    %1165 = vmatpush1.msra.mxu0 0.0
    %1166 = vmatprep.subr.mxu0 0.0
    %1167 = vmatpush1.msra.mxu0 0.0
    %1168 = vmatprep.subr.mxu0 0.0
    %1169 = vmatpush1.msra.mxu0 0.0
    %1170 = vmatprep.subr.mxu0 0.0
    %1171 = vmatpush1.msra.mxu0 0.0
    %1172 = vmatprep.subr.mxu0 0.0
    %1173 = vmatpush1.msra.mxu0 0.0
    %1174 = vmatprep.subr.mxu0 0.0
    %1175 = vmatpush1.msra.mxu0 0.0
    %1176 = vmatprep.subr.mxu0 0.0
    %1177 = vmatpush1.msra.mxu0 0.0
    %1178 = vmatprep.subr.mxu0 0.0
    %1179 = vmatpush1.msra.mxu0 0.0
    %1180 = vmatprep.subr.mxu0 0.0
    %1181 = vmatpush1.msra.mxu0 %v1067
    %1182 = vmatprep.subr.mxu0 0.0
    %1183 = vmatpush1.msra.mxu0 %v1066
    %1184 = vmatprep.subr.mxu0 0.0
    %1185 = vmatpush1.msra.mxu0 %v1065
    %1186 = vmatprep.subr.mxu0 0.0
    %1187 = vmatpush1.msra.mxu0 %v1064
    %1188 = vmatprep.subr.mxu0 0.0
    %1189 = vmatpush2.msra.mxu0 0.0
    %1190 = vmatprep.subr.mxu0 0.0
    %1191 = vmatpush2.msra.mxu0 0.0
    %1192 = vmatprep.subr.mxu0 0.0
    %1193 = vmatpush2.msra.mxu0 0.0
    %1194 = vmatprep.subr.mxu0 0.0
    %1195 = vmatpush2.msra.mxu0 0.0
    %1196 = vmatprep.subr.mxu0 0.0
    %1197 = vmatpush2.msra.mxu0 0.0
    %1198 = vmatprep.subr.mxu0 0.0
    %1199 = vmatpush2.msra.mxu0 0.0
    %1200 = vmatprep.subr.mxu0 0.0
    %1201 = vmatpush2.msra.mxu0 0.0
    %1202 = vmatprep.subr.mxu0 0.0
    %1203 = vmatpush2.msra.mxu0 0.0
    %1204 = vmatprep.subr.mxu0 0.0
    %1205 = vmatpush2.msra.mxu0 0.0
    %1206 = vmatprep.subr.mxu0 0.0
    %1207 = vmatpush2.msra.mxu0 0.0
    %1208 = vmatprep.subr.mxu0 0.0
    %1209 = vmatpush2.msra.mxu0 0.0
    %1210 = vmatprep.subr.mxu0 0.0
    %1211 = vmatpush2.msra.mxu0 0.0
    %1212 = vmatprep.subr.mxu0 0.0
    %1213 = vmatpush2.msra.mxu0 0.0
    %1214 = vmatprep.subr.mxu0 0.0
    %1215 = vmatpush2.msra.mxu0 0.0
    %1216 = vmatprep.subr.mxu0 0.0
    %1217 = vmatpush2.msra.mxu0 0.0
    %1218 = vmatprep.subr.mxu0 0.0
    %1219 = vmatpush2.msra.mxu0 0.0
    %1220 = vmatprep.mubr.f32.mxu0 0.0
    %1221 = vmatmul.mubr.f32.gmra.mxu0 %v184
    %v1222 = vpop.f32.mrf.mxu0
    %v1223 = vadd.f32 0.0, %v1222
    %v1224 = vpop.f32.mrf.mxu0
    %1225 = vdwg.mxu0
    %v1226 = vadd.f32 %v1148, %v1223
    %v1227 = vxor.u32 %v1226, 2147483648
    %v1228 = vmul.f32 %v1227, 1.442695
    %v1229 = vpow.pop %v1228
    %v1230 = vadd.f32 %v1229, 1.0
    %v1231 = vrcp.pop %v1230
    %v1232 = vmul.f32 1.0, %v1231
    %v1233 = vtanh.pop %v1226
    %v1234 = vmul.f32 %v1232, 0.0
    %1236 = vrot.lane.b32.xlu0 %v1233, 64
    %v1237 = vpop.permute.xlu0 %1236
    %v1239 = vmul.f32 %v1232, %v1237
    %1241 = vrot.lane.b32.xlu0 %v1239, 32
    %v1242 = vpop.permute.xlu0 %1241
    %v1244 = vadd.f32 %v1234, %v1242
    %v1245 = vtanh.pop %v1244
    %1247 = vrot.lane.b32.xlu0 %v1245, 64
    %v1248 = vpop.permute.xlu0 %1247
    %v1250 = vmul.f32 %v1232, %v1248
    %1252 = vrot.lane.b32.xlu0 %v1250, 32
    %v1253 = vpop.permute.xlu0 %1252
    %vm1255 = vcmask 254977
    %1256 = vst.msk [vmem:[#allocation3 - $0x1] sm:$0x2] %vm1255, %v1253
    %v1257 = vsel %vm182, %v1253, 0
    %1259 = vmatprep.subr.mxu0 0.0
    %1260 = vmatpush1.msra.mxu0 0.0
    %1261 = vmatprep.subr.mxu0 0.0
    %1262 = vmatpush1.msra.mxu0 0.0
    %1263 = vmatprep.subr.mxu0 0.0
    %1264 = vmatpush1.msra.mxu0 0.0
    %1265 = vmatprep.subr.mxu0 0.0
    %1266 = vmatpush1.msra.mxu0 0.0
    %1267 = vmatprep.subr.mxu0 0.0
    %1268 = vmatpush1.msra.mxu0 0.0
    %1269 = vmatprep.subr.mxu0 0.0
    %1270 = vmatpush1.msra.mxu0 0.0
    %1271 = vmatprep.subr.mxu0 0.0
    %1272 = vmatpush1.msra.mxu0 0.0
    %1273 = vmatprep.subr.mxu0 0.0
    %1274 = vmatpush1.msra.mxu0 0.0
    %1275 = vmatprep.subr.mxu0 0.0
    %1276 = vmatpush1.msra.mxu0 0.0
    %1277 = vmatprep.subr.mxu0 0.0
    %1278 = vmatpush1.msra.mxu0 0.0
    %1279 = vmatprep.subr.mxu0 0.0
    %1280 = vmatpush1.msra.mxu0 0.0
    %1281 = vmatprep.subr.mxu0 0.0
    %1282 = vmatpush1.msra.mxu0 0.0
    %1283 = vmatprep.subr.mxu0 0.0
    %1284 = vmatpush1.msra.mxu0 %v1067
    %1285 = vmatprep.subr.mxu0 0.0
    %1286 = vmatpush1.msra.mxu0 %v1066
    %1287 = vmatprep.subr.mxu0 0.0
    %1288 = vmatpush1.msra.mxu0 %v1065
    %1289 = vmatprep.subr.mxu0 0.0
    %1290 = vmatpush1.msra.mxu0 %v1064
    %1291 = vmatprep.subr.mxu0 0.0
    %1292 = vmatpush2.msra.mxu0 0.0
    %1293 = vmatprep.subr.mxu0 0.0
    %1294 = vmatpush2.msra.mxu0 0.0
    %1295 = vmatprep.subr.mxu0 0.0
    %1296 = vmatpush2.msra.mxu0 0.0
    %1297 = vmatprep.subr.mxu0 0.0
    %1298 = vmatpush2.msra.mxu0 0.0
    %1299 = vmatprep.subr.mxu0 0.0
    %1300 = vmatpush2.msra.mxu0 0.0
    %1301 = vmatprep.subr.mxu0 0.0
    %1302 = vmatpush2.msra.mxu0 0.0
    %1303 = vmatprep.subr.mxu0 0.0
    %1304 = vmatpush2.msra.mxu0 0.0
    %1305 = vmatprep.subr.mxu0 0.0
    %1306 = vmatpush2.msra.mxu0 0.0
    %1307 = vmatprep.subr.mxu0 0.0
    %1308 = vmatpush2.msra.mxu0 0.0
    %1309 = vmatprep.subr.mxu0 0.0
    %1310 = vmatpush2.msra.mxu0 0.0
    %1311 = vmatprep.subr.mxu0 0.0
    %1312 = vmatpush2.msra.mxu0 0.0
    %1313 = vmatprep.subr.mxu0 0.0
    %1314 = vmatpush2.msra.mxu0 0.0
    %1315 = vmatprep.subr.mxu0 0.0
    %1316 = vmatpush2.msra.mxu0 0.0
    %1317 = vmatprep.subr.mxu0 0.0
    %1318 = vmatpush2.msra.mxu0 0.0
    %1319 = vmatprep.subr.mxu0 0.0
    %1320 = vmatpush2.msra.mxu0 0.0
    %1321 = vmatprep.subr.mxu0 0.0
    %1322 = vmatpush2.msra.mxu0 0.0
    %1323 = vmatprep.mubr.f32.mxu0 0.0
    %1324 = vmatmul.mubr.f32.gmra.mxu0 %v1257
    %v1325 = vpop.f32.mrf.mxu0
    %v1326 = vadd.f32 0.0, %v1325
    %v1327 = vpop.f32.mrf.mxu0
    %1328 = vdwg.mxu0
    %v1330 = vrot.slane %v1326, 6
    %v1332 = vadd.f32 %v1148, %v1330
    %v1333 = vxor.u32 %v1332, 2147483648
    %v1334 = vmul.f32 %v1333, 1.442695
    %v1335 = vpow.pop %v1334
    %v1336 = vadd.f32 %v1335, 1.0
    %v1337 = vrcp.pop %v1336
    %v1338 = vmul.f32 1.0, %v1337
    %v1339 = vtanh.pop %v1332
    %v1341 = vrot.slane %v1244, 6
    %v1343 = vmul.f32 %v1338, %v1341
    %1345 = vrot.lane.b32.xlu0 %v1339, 64
    %v1346 = vpop.permute.xlu0 %1345
    %v1348 = vmul.f32 %v1338, %v1346
    %1350 = vrot.lane.b32.xlu0 %v1348, 32
    %v1351 = vpop.permute.xlu0 %1350
    %v1353 = vadd.f32 %v1343, %v1351
    %v1354 = vtanh.pop %v1353
    %1356 = vrot.lane.b32.xlu0 %v1354, 64
    %v1357 = vpop.permute.xlu0 %1356
    %v1359 = vmul.f32 %v1338, %v1357
    %1361 = vrot.lane.b32.xlu0 %v1359, 32
    %v1362 = vpop.permute.xlu0 %1361
    %vm1364 = vcmask 257027
    %1365 = vst.msk [vmem:[#allocation3 - $0x2] sm:$0x8] %vm1364, %v1362
    %v1366 = vrot.slane %v1359, 2
    %1367 = vrot.lane.b32.xlu0 %v1366, 32
    %v1368 = vpop.permute.xlu0 %1367
    %v1369 = vsel %vm182, %v1368, 0
    %1371 = vmatprep.subr.mxu0 0.0
    %1372 = vmatpush1.msra.mxu0 0.0
    %1373 = vmatprep.subr.mxu0 0.0
    %1374 = vmatpush1.msra.mxu0 0.0
    %1375 = vmatprep.subr.mxu0 0.0
    %1376 = vmatpush1.msra.mxu0 0.0
    %1377 = vmatprep.subr.mxu0 0.0
    %1378 = vmatpush1.msra.mxu0 0.0
    %1379 = vmatprep.subr.mxu0 0.0
    %1380 = vmatpush1.msra.mxu0 0.0
    %1381 = vmatprep.subr.mxu0 0.0
    %1382 = vmatpush1.msra.mxu0 0.0
    %1383 = vmatprep.subr.mxu0 0.0
    %1384 = vmatpush1.msra.mxu0 0.0
    %1385 = vmatprep.subr.mxu0 0.0
    %1386 = vmatpush1.msra.mxu0 0.0
    %1387 = vmatprep.subr.mxu0 0.0
    %1388 = vmatpush1.msra.mxu0 0.0
    %1389 = vmatprep.subr.mxu0 0.0
    %1390 = vmatpush1.msra.mxu0 0.0
    %1391 = vmatprep.subr.mxu0 0.0
    %1392 = vmatpush1.msra.mxu0 0.0
    %1393 = vmatprep.subr.mxu0 0.0
    %1394 = vmatpush1.msra.mxu0 0.0
    %1395 = vmatprep.subr.mxu0 0.0
    %1396 = vmatpush1.msra.mxu0 %v1067
    %1397 = vmatprep.subr.mxu0 0.0
    %1398 = vmatpush1.msra.mxu0 %v1066
    %1399 = vmatprep.subr.mxu0 0.0
    %1400 = vmatpush1.msra.mxu0 %v1065
    %1401 = vmatprep.subr.mxu0 0.0
    %1402 = vmatpush1.msra.mxu0 %v1064
    %1403 = vmatprep.subr.mxu0 0.0
    %1404 = vmatpush2.msra.mxu0 0.0
    %1405 = vmatprep.subr.mxu0 0.0
    %1406 = vmatpush2.msra.mxu0 0.0
    %1407 = vmatprep.subr.mxu0 0.0
    %1408 = vmatpush2.msra.mxu0 0.0
    %1409 = vmatprep.subr.mxu0 0.0
    %1410 = vmatpush2.msra.mxu0 0.0
    %1411 = vmatprep.subr.mxu0 0.0
    %1412 = vmatpush2.msra.mxu0 0.0
    %1413 = vmatprep.subr.mxu0 0.0
    %1414 = vmatpush2.msra.mxu0 0.0
    %1415 = vmatprep.subr.mxu0 0.0
    %1416 = vmatpush2.msra.mxu0 0.0
    %1417 = vmatprep.subr.mxu0 0.0
    %1418 = vmatpush2.msra.mxu0 0.0
    %1419 = vmatprep.subr.mxu0 0.0
    %1420 = vmatpush2.msra.mxu0 0.0
    %1421 = vmatprep.subr.mxu0 0.0
    %1422 = vmatpush2.msra.mxu0 0.0
    %1423 = vmatprep.subr.mxu0 0.0
    %1424 = vmatpush2.msra.mxu0 0.0
    %1425 = vmatprep.subr.mxu0 0.0
    %1426 = vmatpush2.msra.mxu0 0.0
    %1427 = vmatprep.subr.mxu0 0.0
    %1428 = vmatpush2.msra.mxu0 0.0
    %1429 = vmatprep.subr.mxu0 0.0
    %1430 = vmatpush2.msra.mxu0 0.0
    %1431 = vmatprep.subr.mxu0 0.0
    %1432 = vmatpush2.msra.mxu0 0.0
    %1433 = vmatprep.subr.mxu0 0.0
    %1434 = vmatpush2.msra.mxu0 0.0
    %1435 = vmatprep.mubr.f32.mxu0 0.0
    %1436 = vmatmul.mubr.f32.gmra.mxu0 %v1369
    %v1437 = vpop.f32.mrf.mxu0
    %v1438 = vadd.f32 0.0, %v1437
    %v1439 = vpop.f32.mrf.mxu0
    %1440 = vdwg.mxu0
    %v1442 = vrot.slane %v1438, 4
    %v1444 = vadd.f32 %v1148, %v1442
    %v1445 = vxor.u32 %v1444, 2147483648
    %v1446 = vmul.f32 %v1445, 1.442695
    %v1447 = vpow.pop %v1446
    %v1448 = vadd.f32 %v1447, 1.0
    %v1449 = vrcp.pop %v1448
    %v1450 = vmul.f32 1.0, %v1449
    %v1451 = vtanh.pop %v1444
    %v1453 = vrot.slane %v1353, 6
    %v1455 = vmul.f32 %v1450, %v1453
    %1457 = vrot.lane.b32.xlu0 %v1451, 64
    %v1458 = vpop.permute.xlu0 %1457
    %v1460 = vmul.f32 %v1450, %v1458
    %1462 = vrot.lane.b32.xlu0 %v1460, 32
    %v1463 = vpop.permute.xlu0 %1462
    %v1465 = vadd.f32 %v1455, %v1463
    %v1466 = vtanh.pop %v1465
    %1468 = vrot.lane.b32.xlu0 %v1466, 64
    %v1469 = vpop.permute.xlu0 %1468
    %v1471 = vmul.f32 %v1450, %v1469
    %1473 = vrot.lane.b32.xlu0 %v1471, 32
    %v1474 = vpop.permute.xlu0 %1473
    %vm1476 = vcmask 259077
    %1477 = vst.msk [vmem:[#allocation3 - $0x3] sm:$0x20] %vm1476, %v1474
    %v1478 = vrot.slane %v1471, 4
    %1479 = vrot.lane.b32.xlu0 %v1478, 32
    %v1480 = vpop.permute.xlu0 %1479
    %v1481 = vsel %vm182, %v1480, 0
    %1483 = vmatprep.subr.mxu0 0.0
    %1484 = vmatpush1.msra.mxu0 0.0
    %1485 = vmatprep.subr.mxu0 0.0
    %1486 = vmatpush1.msra.mxu0 0.0
    %1487 = vmatprep.subr.mxu0 0.0
    %1488 = vmatpush1.msra.mxu0 0.0
    %1489 = vmatprep.subr.mxu0 0.0
    %1490 = vmatpush1.msra.mxu0 0.0
    %1491 = vmatprep.subr.mxu0 0.0
    %1492 = vmatpush1.msra.mxu0 0.0
    %1493 = vmatprep.subr.mxu0 0.0
    %1494 = vmatpush1.msra.mxu0 0.0
    %1495 = vmatprep.subr.mxu0 0.0
    %1496 = vmatpush1.msra.mxu0 0.0
    %1497 = vmatprep.subr.mxu0 0.0
    %1498 = vmatpush1.msra.mxu0 0.0
    %1499 = vmatprep.subr.mxu0 0.0
    %1500 = vmatpush1.msra.mxu0 0.0
    %1501 = vmatprep.subr.mxu0 0.0
    %1502 = vmatpush1.msra.mxu0 0.0
    %1503 = vmatprep.subr.mxu0 0.0
    %1504 = vmatpush1.msra.mxu0 0.0
    %1505 = vmatprep.subr.mxu0 0.0
    %1506 = vmatpush1.msra.mxu0 0.0
    %1507 = vmatprep.subr.mxu0 0.0
    %1508 = vmatpush1.msra.mxu0 %v1067
    %1509 = vmatprep.subr.mxu0 0.0
    %1510 = vmatpush1.msra.mxu0 %v1066
    %1511 = vmatprep.subr.mxu0 0.0
    %1512 = vmatpush1.msra.mxu0 %v1065
    %1513 = vmatprep.subr.mxu0 0.0
    %1514 = vmatpush1.msra.mxu0 %v1064
    %1515 = vmatprep.subr.mxu0 0.0
    %1516 = vmatpush2.msra.mxu0 0.0
    %1517 = vmatprep.subr.mxu0 0.0
    %1518 = vmatpush2.msra.mxu0 0.0
    %1519 = vmatprep.subr.mxu0 0.0
    %1520 = vmatpush2.msra.mxu0 0.0
    %1521 = vmatprep.subr.mxu0 0.0
    %1522 = vmatpush2.msra.mxu0 0.0
    %1523 = vmatprep.subr.mxu0 0.0
    %1524 = vmatpush2.msra.mxu0 0.0
    %1525 = vmatprep.subr.mxu0 0.0
    %1526 = vmatpush2.msra.mxu0 0.0
    %1527 = vmatprep.subr.mxu0 0.0
    %1528 = vmatpush2.msra.mxu0 0.0
    %1529 = vmatprep.subr.mxu0 0.0
    %1530 = vmatpush2.msra.mxu0 0.0
    %1531 = vmatprep.subr.mxu0 0.0
    %1532 = vmatpush2.msra.mxu0 0.0
    %1533 = vmatprep.subr.mxu0 0.0
    %1534 = vmatpush2.msra.mxu0 0.0
    %1535 = vmatprep.subr.mxu0 0.0
    %1536 = vmatpush2.msra.mxu0 0.0
    %1537 = vmatprep.subr.mxu0 0.0
    %1538 = vmatpush2.msra.mxu0 0.0
    %1539 = vmatprep.subr.mxu0 0.0
    %1540 = vmatpush2.msra.mxu0 0.0
    %1541 = vmatprep.subr.mxu0 0.0
    %1542 = vmatpush2.msra.mxu0 0.0
    %1543 = vmatprep.subr.mxu0 0.0
    %1544 = vmatpush2.msra.mxu0 0.0
    %1545 = vmatprep.subr.mxu0 0.0
    %1546 = vmatpush2.msra.mxu0 0.0
    %1547 = vmatprep.mubr.f32.mxu0 0.0
    %1548 = vmatmul.mubr.f32.gmra.mxu0 %v1481
    %v1549 = vpop.f32.mrf.mxu0
    %v1550 = vadd.f32 0.0, %v1549
    %v1551 = vpop.f32.mrf.mxu0
    %1552 = vdwg.mxu0
    %v1554 = vrot.slane %v1550, 2
    %v1556 = vadd.f32 %v1148, %v1554
    %v1557 = vxor.u32 %v1556, 2147483648
    %v1558 = vmul.f32 %v1557, 1.442695
    %v1559 = vpow.pop %v1558
    %v1560 = vadd.f32 %v1559, 1.0
    %v1561 = vrcp.pop %v1560
    %v1562 = vmul.f32 1.0, %v1561
    %v1563 = vtanh.pop %v1556
    %v1565 = vrot.slane %v1465, 6
    %v1567 = vmul.f32 %v1562, %v1565
    %1569 = vrot.lane.b32.xlu0 %v1563, 64
    %v1570 = vpop.permute.xlu0 %1569
    %v1572 = vmul.f32 %v1562, %v1570
    %1574 = vrot.lane.b32.xlu0 %v1572, 32
    %v1575 = vpop.permute.xlu0 %1574
    %v1577 = vadd.f32 %v1567, %v1575
    %v1578 = vtanh.pop %v1577
    %1580 = vrot.lane.b32.xlu0 %v1578, 64
    %v1581 = vpop.permute.xlu0 %1580
    %v1583 = vmul.f32 %v1562, %v1581
    %1585 = vrot.lane.b32.xlu0 %v1583, 32
    %v1586 = vpop.permute.xlu0 %1585
    %vm1588 = vcmask 261127
    %1589 = vst.msk [vmem:[#allocation3 - $0x4] sm:$0x80] %vm1588, %v1586
    %v1590 = vrot.slane %v1583, 6
    %1591 = vrot.lane.b32.xlu0 %v1590, 32
    %v1592 = vpop.permute.xlu0 %1591
    %v1593 = vsel %vm182, %v1592, 0
    %1595 = vmatprep.subr.mxu0 0.0
    %1596 = vmatpush1.msra.mxu0 0.0
    %1597 = vmatprep.subr.mxu0 0.0
    %1598 = vmatpush1.msra.mxu0 0.0
    %1599 = vmatprep.subr.mxu0 0.0
    %1600 = vmatpush1.msra.mxu0 0.0
    %1601 = vmatprep.subr.mxu0 0.0
    %1602 = vmatpush1.msra.mxu0 0.0
    %1603 = vmatprep.subr.mxu0 0.0
    %1604 = vmatpush1.msra.mxu0 0.0
    %1605 = vmatprep.subr.mxu0 0.0
    %1606 = vmatpush1.msra.mxu0 0.0
    %1607 = vmatprep.subr.mxu0 0.0
    %1608 = vmatpush1.msra.mxu0 0.0
    %1609 = vmatprep.subr.mxu0 0.0
    %1610 = vmatpush1.msra.mxu0 0.0
    %1611 = vmatprep.subr.mxu0 0.0
    %1612 = vmatpush1.msra.mxu0 0.0
    %1613 = vmatprep.subr.mxu0 0.0
    %1614 = vmatpush1.msra.mxu0 0.0
    %1615 = vmatprep.subr.mxu0 0.0
    %1616 = vmatpush1.msra.mxu0 0.0
    %1617 = vmatprep.subr.mxu0 0.0
    %1618 = vmatpush1.msra.mxu0 0.0
    %1619 = vmatprep.subr.mxu0 0.0
    %1620 = vmatpush1.msra.mxu0 %v1067
    %1621 = vmatprep.subr.mxu0 0.0
    %1622 = vmatpush1.msra.mxu0 %v1066
    %1623 = vmatprep.subr.mxu0 0.0
    %1624 = vmatpush1.msra.mxu0 %v1065
    %1625 = vmatprep.subr.mxu0 0.0
    %1626 = vmatpush1.msra.mxu0 %v1064
    %1627 = vmatprep.subr.mxu0 0.0
    %1628 = vmatpush2.msra.mxu0 0.0
    %1629 = vmatprep.subr.mxu0 0.0
    %1630 = vmatpush2.msra.mxu0 0.0
    %1631 = vmatprep.subr.mxu0 0.0
    %1632 = vmatpush2.msra.mxu0 0.0
    %1633 = vmatprep.subr.mxu0 0.0
    %1634 = vmatpush2.msra.mxu0 0.0
    %1635 = vmatprep.subr.mxu0 0.0
    %1636 = vmatpush2.msra.mxu0 0.0
    %1637 = vmatprep.subr.mxu0 0.0
    %1638 = vmatpush2.msra.mxu0 0.0
    %1639 = vmatprep.subr.mxu0 0.0
    %1640 = vmatpush2.msra.mxu0 0.0
    %1641 = vmatprep.subr.mxu0 0.0
    %1642 = vmatpush2.msra.mxu0 0.0
    %1643 = vmatprep.subr.mxu0 0.0
    %1644 = vmatpush2.msra.mxu0 0.0
    %1645 = vmatprep.subr.mxu0 0.0
    %1646 = vmatpush2.msra.mxu0 0.0
    %1647 = vmatprep.subr.mxu0 0.0
    %1648 = vmatpush2.msra.mxu0 0.0
    %1649 = vmatprep.subr.mxu0 0.0
    %1650 = vmatpush2.msra.mxu0 0.0
    %1651 = vmatprep.subr.mxu0 0.0
    %1652 = vmatpush2.msra.mxu0 0.0
    %1653 = vmatprep.subr.mxu0 0.0
    %1654 = vmatpush2.msra.mxu0 0.0
    %1655 = vmatprep.subr.mxu0 0.0
    %1656 = vmatpush2.msra.mxu0 0.0
    %1657 = vmatprep.subr.mxu0 0.0
    %1658 = vmatpush2.msra.mxu0 0.0
    %1659 = vmatprep.mubr.f32.mxu0 0.0
    %1660 = vmatmul.mubr.f32.gmra.mxu0 %v1593
    %v1661 = vpop.f32.mrf.mxu0
    %v1662 = vadd.f32 0.0, %v1661
    %v1663 = vpop.f32.mrf.mxu0
    %1664 = vdwg.mxu0
    %v1665 = vadd.f32 %v1153, %v1662
    %v1666 = vxor.u32 %v1665, 2147483648
    %v1667 = vmul.f32 %v1666, 1.442695
    %v1668 = vpow.pop %v1667
    %v1669 = vadd.f32 %v1668, 1.0
    %v1670 = vrcp.pop %v1669
    %v1671 = vmul.f32 1.0, %v1670
    %v1672 = vtanh.pop %v1665
    %v1674 = vrot.slane %v1577, 6
    %v1676 = vmul.f32 %v1671, %v1674
    %1678 = vrot.lane.b32.xlu0 %v1672, 64
    %v1679 = vpop.permute.xlu0 %1678
    %v1681 = vmul.f32 %v1671, %v1679
    %1683 = vrot.lane.b32.xlu0 %v1681, 32
    %v1684 = vpop.permute.xlu0 %1683
    %v1686 = vadd.f32 %v1676, %v1684
    %v1687 = vtanh.pop %v1686
    %1689 = vrot.lane.b32.xlu0 %v1687, 64
    %v1690 = vpop.permute.xlu0 %1689
    %v1692 = vmul.f32 %v1671, %v1690
    %1694 = vrot.lane.b32.xlu0 %v1692, 32
    %v1695 = vpop.permute.xlu0 %1694
    %1697 = vst.msk [vmem:[#allocation3 + $0x3] sm:$0x2] %vm1255, %v1695
    %v1698 = vsel %vm182, %v1695, 0
    %1700 = vmatprep.subr.mxu0 0.0
    %1701 = vmatpush1.msra.mxu0 0.0
    %1702 = vmatprep.subr.mxu0 0.0
    %1703 = vmatpush1.msra.mxu0 0.0
    %1704 = vmatprep.subr.mxu0 0.0
    %1705 = vmatpush1.msra.mxu0 0.0
    %1706 = vmatprep.subr.mxu0 0.0
    %1707 = vmatpush1.msra.mxu0 0.0
    %1708 = vmatprep.subr.mxu0 0.0
    %1709 = vmatpush1.msra.mxu0 0.0
    %1710 = vmatprep.subr.mxu0 0.0
    %1711 = vmatpush1.msra.mxu0 0.0
    %1712 = vmatprep.subr.mxu0 0.0
    %1713 = vmatpush1.msra.mxu0 0.0
    %1714 = vmatprep.subr.mxu0 0.0
    %1715 = vmatpush1.msra.mxu0 0.0
    %1716 = vmatprep.subr.mxu0 0.0
    %1717 = vmatpush1.msra.mxu0 0.0
    %1718 = vmatprep.subr.mxu0 0.0
    %1719 = vmatpush1.msra.mxu0 0.0
    %1720 = vmatprep.subr.mxu0 0.0
    %1721 = vmatpush1.msra.mxu0 0.0
    %1722 = vmatprep.subr.mxu0 0.0
    %1723 = vmatpush1.msra.mxu0 0.0
    %1724 = vmatprep.subr.mxu0 0.0
    %1725 = vmatpush1.msra.mxu0 %v1067
    %1726 = vmatprep.subr.mxu0 0.0
    %1727 = vmatpush1.msra.mxu0 %v1066
    %1728 = vmatprep.subr.mxu0 0.0
    %1729 = vmatpush1.msra.mxu0 %v1065
    %1730 = vmatprep.subr.mxu0 0.0
    %1731 = vmatpush1.msra.mxu0 %v1064
    %1732 = vmatprep.subr.mxu0 0.0
    %1733 = vmatpush2.msra.mxu0 0.0
    %1734 = vmatprep.subr.mxu0 0.0
    %1735 = vmatpush2.msra.mxu0 0.0
    %1736 = vmatprep.subr.mxu0 0.0
    %1737 = vmatpush2.msra.mxu0 0.0
    %1738 = vmatprep.subr.mxu0 0.0
    %1739 = vmatpush2.msra.mxu0 0.0
    %1740 = vmatprep.subr.mxu0 0.0
    %1741 = vmatpush2.msra.mxu0 0.0
    %1742 = vmatprep.subr.mxu0 0.0
    %1743 = vmatpush2.msra.mxu0 0.0
    %1744 = vmatprep.subr.mxu0 0.0
    %1745 = vmatpush2.msra.mxu0 0.0
    %1746 = vmatprep.subr.mxu0 0.0
    %1747 = vmatpush2.msra.mxu0 0.0
    %1748 = vmatprep.subr.mxu0 0.0
    %1749 = vmatpush2.msra.mxu0 0.0
    %1750 = vmatprep.subr.mxu0 0.0
    %1751 = vmatpush2.msra.mxu0 0.0
    %1752 = vmatprep.subr.mxu0 0.0
    %1753 = vmatpush2.msra.mxu0 0.0
    %1754 = vmatprep.subr.mxu0 0.0
    %1755 = vmatpush2.msra.mxu0 0.0
    %1756 = vmatprep.subr.mxu0 0.0
    %1757 = vmatpush2.msra.mxu0 0.0
    %1758 = vmatprep.subr.mxu0 0.0
    %1759 = vmatpush2.msra.mxu0 0.0
    %1760 = vmatprep.subr.mxu0 0.0
    %1761 = vmatpush2.msra.mxu0 0.0
    %1762 = vmatprep.subr.mxu0 0.0
    %1763 = vmatpush2.msra.mxu0 0.0
    %1764 = vmatprep.mubr.f32.mxu0 0.0
    %1765 = vmatmul.mubr.f32.gmra.mxu0 %v1698
    %v1766 = vpop.f32.mrf.mxu0
    %v1767 = vadd.f32 0.0, %v1766
    %v1768 = vpop.f32.mrf.mxu0
    %1769 = vdwg.mxu0
    %v1771 = vrot.slane %v1767, 6
    %v1773 = vadd.f32 %v1153, %v1771
    %v1774 = vxor.u32 %v1773, 2147483648
    %v1775 = vmul.f32 %v1774, 1.442695
    %v1776 = vpow.pop %v1775
    %v1777 = vadd.f32 %v1776, 1.0
    %v1778 = vrcp.pop %v1777
    %v1779 = vmul.f32 1.0, %v1778
    %v1780 = vtanh.pop %v1773
    %v1782 = vrot.slane %v1686, 6
    %v1784 = vmul.f32 %v1779, %v1782
    %1786 = vrot.lane.b32.xlu0 %v1780, 64
    %v1787 = vpop.permute.xlu0 %1786
    %v1789 = vmul.f32 %v1779, %v1787
    %1791 = vrot.lane.b32.xlu0 %v1789, 32
    %v1792 = vpop.permute.xlu0 %1791
    %v1794 = vadd.f32 %v1784, %v1792
    %v1795 = vtanh.pop %v1794
    %1797 = vrot.lane.b32.xlu0 %v1795, 64
    %v1798 = vpop.permute.xlu0 %1797
    %v1800 = vmul.f32 %v1779, %v1798
    %1802 = vrot.lane.b32.xlu0 %v1800, 32
    %v1803 = vpop.permute.xlu0 %1802
    %1805 = vst.msk [vmem:[#allocation3 + $0x2] sm:$0x8] %vm1364, %v1803
    %v1806 = vrot.slane %v1800, 2
    %1807 = vrot.lane.b32.xlu0 %v1806, 32
    %v1808 = vpop.permute.xlu0 %1807
    %v1809 = vsel %vm182, %v1808, 0
    %1811 = vmatprep.subr.mxu0 0.0
    %1812 = vmatpush1.msra.mxu0 0.0
    %1813 = vmatprep.subr.mxu0 0.0
    %1814 = vmatpush1.msra.mxu0 0.0
    %1815 = vmatprep.subr.mxu0 0.0
    %1816 = vmatpush1.msra.mxu0 0.0
    %1817 = vmatprep.subr.mxu0 0.0
    %1818 = vmatpush1.msra.mxu0 0.0
    %1819 = vmatprep.subr.mxu0 0.0
    %1820 = vmatpush1.msra.mxu0 0.0
    %1821 = vmatprep.subr.mxu0 0.0
    %1822 = vmatpush1.msra.mxu0 0.0
    %1823 = vmatprep.subr.mxu0 0.0
    %1824 = vmatpush1.msra.mxu0 0.0
    %1825 = vmatprep.subr.mxu0 0.0
    %1826 = vmatpush1.msra.mxu0 0.0
    %1827 = vmatprep.subr.mxu0 0.0
    %1828 = vmatpush1.msra.mxu0 0.0
    %1829 = vmatprep.subr.mxu0 0.0
    %1830 = vmatpush1.msra.mxu0 0.0
    %1831 = vmatprep.subr.mxu0 0.0
    %1832 = vmatpush1.msra.mxu0 0.0
    %1833 = vmatprep.subr.mxu0 0.0
    %1834 = vmatpush1.msra.mxu0 0.0
    %1835 = vmatprep.subr.mxu0 0.0
    %1836 = vmatpush1.msra.mxu0 %v1067
    %1837 = vmatprep.subr.mxu0 0.0
    %1838 = vmatpush1.msra.mxu0 %v1066
    %1839 = vmatprep.subr.mxu0 0.0
    %1840 = vmatpush1.msra.mxu0 %v1065
    %1841 = vmatprep.subr.mxu0 0.0
    %1842 = vmatpush1.msra.mxu0 %v1064
    %1843 = vmatprep.subr.mxu0 0.0
    %1844 = vmatpush2.msra.mxu0 0.0
    %1845 = vmatprep.subr.mxu0 0.0
    %1846 = vmatpush2.msra.mxu0 0.0
    %1847 = vmatprep.subr.mxu0 0.0
    %1848 = vmatpush2.msra.mxu0 0.0
    %1849 = vmatprep.subr.mxu0 0.0
    %1850 = vmatpush2.msra.mxu0 0.0
    %1851 = vmatprep.subr.mxu0 0.0
    %1852 = vmatpush2.msra.mxu0 0.0
    %1853 = vmatprep.subr.mxu0 0.0
    %1854 = vmatpush2.msra.mxu0 0.0
    %1855 = vmatprep.subr.mxu0 0.0
    %1856 = vmatpush2.msra.mxu0 0.0
    %1857 = vmatprep.subr.mxu0 0.0
    %1858 = vmatpush2.msra.mxu0 0.0
    %1859 = vmatprep.subr.mxu0 0.0
    %1860 = vmatpush2.msra.mxu0 0.0
    %1861 = vmatprep.subr.mxu0 0.0
    %1862 = vmatpush2.msra.mxu0 0.0
    %1863 = vmatprep.subr.mxu0 0.0
    %1864 = vmatpush2.msra.mxu0 0.0
    %1865 = vmatprep.subr.mxu0 0.0
    %1866 = vmatpush2.msra.mxu0 0.0
    %1867 = vmatprep.subr.mxu0 0.0
    %1868 = vmatpush2.msra.mxu0 0.0
    %1869 = vmatprep.subr.mxu0 0.0
    %1870 = vmatpush2.msra.mxu0 0.0
    %1871 = vmatprep.subr.mxu0 0.0
    %1872 = vmatpush2.msra.mxu0 0.0
    %1873 = vmatprep.subr.mxu0 0.0
    %1874 = vmatpush2.msra.mxu0 0.0
    %1875 = vmatprep.mubr.f32.mxu0 0.0
    %1876 = vmatmul.mubr.f32.gmra.mxu0 %v1809
    %v1877 = vpop.f32.mrf.mxu0
    %v1878 = vadd.f32 0.0, %v1877
    %v1879 = vpop.f32.mrf.mxu0
    %1880 = vdwg.mxu0
    %v1882 = vrot.slane %v1878, 4
    %v1884 = vadd.f32 %v1153, %v1882
    %v1885 = vxor.u32 %v1884, 2147483648
    %v1886 = vmul.f32 %v1885, 1.442695
    %v1887 = vpow.pop %v1886
    %v1888 = vadd.f32 %v1887, 1.0
    %v1889 = vrcp.pop %v1888
    %v1890 = vmul.f32 1.0, %v1889
    %v1891 = vtanh.pop %v1884
    %v1893 = vrot.slane %v1794, 6
    %v1895 = vmul.f32 %v1890, %v1893
    %1897 = vrot.lane.b32.xlu0 %v1891, 64
    %v1898 = vpop.permute.xlu0 %1897
    %v1900 = vmul.f32 %v1890, %v1898
    %1902 = vrot.lane.b32.xlu0 %v1900, 32
    %v1903 = vpop.permute.xlu0 %1902
    %v1905 = vadd.f32 %v1895, %v1903
    %v1906 = vtanh.pop %v1905
    %1908 = vrot.lane.b32.xlu0 %v1906, 64
    %v1909 = vpop.permute.xlu0 %1908
    %v1911 = vmul.f32 %v1890, %v1909
    %1913 = vrot.lane.b32.xlu0 %v1911, 32
    %v1914 = vpop.permute.xlu0 %1913
    %1916 = vst.msk [vmem:[#allocation3 + $0x1] sm:$0x20] %vm1476, %v1914
    %v1917 = vrot.slane %v1911, 4
    %1918 = vrot.lane.b32.xlu0 %v1917, 32
    %v1919 = vpop.permute.xlu0 %1918
    %v1920 = vsel %vm182, %v1919, 0
    %1922 = vmatprep.subr.mxu0 0.0
    %1923 = vmatpush1.msra.mxu0 0.0
    %1924 = vmatprep.subr.mxu0 0.0
    %1925 = vmatpush1.msra.mxu0 0.0
    %1926 = vmatprep.subr.mxu0 0.0
    %1927 = vmatpush1.msra.mxu0 0.0
    %1928 = vmatprep.subr.mxu0 0.0
    %1929 = vmatpush1.msra.mxu0 0.0
    %1930 = vmatprep.subr.mxu0 0.0
    %1931 = vmatpush1.msra.mxu0 0.0
    %1932 = vmatprep.subr.mxu0 0.0
    %1933 = vmatpush1.msra.mxu0 0.0
    %1934 = vmatprep.subr.mxu0 0.0
    %1935 = vmatpush1.msra.mxu0 0.0
    %1936 = vmatprep.subr.mxu0 0.0
    %1937 = vmatpush1.msra.mxu0 0.0
    %1938 = vmatprep.subr.mxu0 0.0
    %1939 = vmatpush1.msra.mxu0 0.0
    %1940 = vmatprep.subr.mxu0 0.0
    %1941 = vmatpush1.msra.mxu0 0.0
    %1942 = vmatprep.subr.mxu0 0.0
    %1943 = vmatpush1.msra.mxu0 0.0
    %1944 = vmatprep.subr.mxu0 0.0
    %1945 = vmatpush1.msra.mxu0 0.0
    %1946 = vmatprep.subr.mxu0 0.0
    %1947 = vmatpush1.msra.mxu0 %v1067
    %1948 = vmatprep.subr.mxu0 0.0
    %1949 = vmatpush1.msra.mxu0 %v1066
    %1950 = vmatprep.subr.mxu0 0.0
    %1951 = vmatpush1.msra.mxu0 %v1065
    %1952 = vmatprep.subr.mxu0 0.0
    %1953 = vmatpush1.msra.mxu0 %v1064
    %1954 = vmatprep.subr.mxu0 0.0
    %1955 = vmatpush2.msra.mxu0 0.0
    %1956 = vmatprep.subr.mxu0 0.0
    %1957 = vmatpush2.msra.mxu0 0.0
    %1958 = vmatprep.subr.mxu0 0.0
    %1959 = vmatpush2.msra.mxu0 0.0
    %1960 = vmatprep.subr.mxu0 0.0
    %1961 = vmatpush2.msra.mxu0 0.0
    %1962 = vmatprep.subr.mxu0 0.0
    %1963 = vmatpush2.msra.mxu0 0.0
    %1964 = vmatprep.subr.mxu0 0.0
    %1965 = vmatpush2.msra.mxu0 0.0
    %1966 = vmatprep.subr.mxu0 0.0
    %1967 = vmatpush2.msra.mxu0 0.0
    %1968 = vmatprep.subr.mxu0 0.0
    %1969 = vmatpush2.msra.mxu0 0.0
    %1970 = vmatprep.subr.mxu0 0.0
    %1971 = vmatpush2.msra.mxu0 0.0
    %1972 = vmatprep.subr.mxu0 0.0
    %1973 = vmatpush2.msra.mxu0 0.0
    %1974 = vmatprep.subr.mxu0 0.0
    %1975 = vmatpush2.msra.mxu0 0.0
    %1976 = vmatprep.subr.mxu0 0.0
    %1977 = vmatpush2.msra.mxu0 0.0
    %1978 = vmatprep.subr.mxu0 0.0
    %1979 = vmatpush2.msra.mxu0 0.0
    %1980 = vmatprep.subr.mxu0 0.0
    %1981 = vmatpush2.msra.mxu0 0.0
    %1982 = vmatprep.subr.mxu0 0.0
    %1983 = vmatpush2.msra.mxu0 0.0
    %1984 = vmatprep.subr.mxu0 0.0
    %1985 = vmatpush2.msra.mxu0 0.0
    %1986 = vmatprep.mubr.f32.mxu0 0.0
    %1987 = vmatmul.mubr.f32.gmra.mxu0 %v1920
    %v1988 = vpop.f32.mrf.mxu0
    %v1989 = vadd.f32 0.0, %v1988
    %v1990 = vpop.f32.mrf.mxu0
    %1991 = vdwg.mxu0
    %v1993 = vrot.slane %v1989, 2
    %v1995 = vadd.f32 %v1153, %v1993
    %v1996 = vxor.u32 %v1995, 2147483648
    %v1997 = vmul.f32 %v1996, 1.442695
    %v1998 = vpow.pop %v1997
    %v1999 = vadd.f32 %v1998, 1.0
    %v2000 = vrcp.pop %v1999
    %v2001 = vmul.f32 1.0, %v2000
    %v2002 = vtanh.pop %v1995
    %v2004 = vrot.slane %v1905, 6
    %v2006 = vmul.f32 %v2001, %v2004
    %2008 = vrot.lane.b32.xlu0 %v2002, 64
    %v2009 = vpop.permute.xlu0 %2008
    %v2011 = vmul.f32 %v2001, %v2009
    %2013 = vrot.lane.b32.xlu0 %v2011, 32
    %v2014 = vpop.permute.xlu0 %2013
    %v2016 = vadd.f32 %v2006, %v2014
    %v2017 = vtanh.pop %v2016
    %2019 = vrot.lane.b32.xlu0 %v2017, 64
    %v2020 = vpop.permute.xlu0 %2019
    %v2022 = vmul.f32 %v2001, %v2020
    %2024 = vrot.lane.b32.xlu0 %v2022, 32
    %v2025 = vpop.permute.xlu0 %2024
    %2027 = vst.msk [vmem:[#allocation3] sm:$0x80] %vm1588, %v2025
    %v2028 = vld [vmem:[#allocation3] sm:$0xff]
    %v2029 = vld [vmem:[%s7] sm:$0xff]
    %v2030 = vld [vmem:[%s7 + $0x8] sm:$0xff]
    %v2031 = vld [vmem:[%s7 + $0x10] sm:$0xff]
    %v2032 = vld [vmem:[%s7 + $0x18] sm:$0xff]
    %v2033 = vld [vmem:[%s8] sm:$0x1]
    %v2035 = vlaneseq
    %v2036 = vshrl.u32 %v2035, 7
    %v2037 = vsub.s32 0, %v2036
    %v2038 = vrot.slane %v2033, %v2037
    %v2041 = vsel %vm182, %v2028, 0
    %2043 = vmatprep.subr.mxu0 0.0
    %2044 = vmatpush1.msra.mxu0 0.0
    %2045 = vmatprep.subr.mxu0 0.0
    %2046 = vmatpush1.msra.mxu0 0.0
    %2047 = vmatprep.subr.mxu0 0.0
    %2048 = vmatpush1.msra.mxu0 0.0
    %2049 = vmatprep.subr.mxu0 0.0
    %2050 = vmatpush1.msra.mxu0 0.0
    %2051 = vmatprep.subr.mxu0 0.0
    %2052 = vmatpush1.msra.mxu0 0.0
    %2053 = vmatprep.subr.mxu0 0.0
    %2054 = vmatpush1.msra.mxu0 0.0
    %2055 = vmatprep.subr.mxu0 0.0
    %2056 = vmatpush1.msra.mxu0 0.0
    %2057 = vmatprep.subr.mxu0 0.0
    %2058 = vmatpush1.msra.mxu0 0.0
    %2059 = vmatprep.subr.mxu0 0.0
    %2060 = vmatpush1.msra.mxu0 0.0
    %2061 = vmatprep.subr.mxu0 0.0
    %2062 = vmatpush1.msra.mxu0 0.0
    %2063 = vmatprep.subr.mxu0 0.0
    %2064 = vmatpush1.msra.mxu0 0.0
    %2065 = vmatprep.subr.mxu0 0.0
    %2066 = vmatpush1.msra.mxu0 0.0
    %2067 = vmatprep.subr.mxu0 0.0
    %2068 = vmatpush1.msra.mxu0 %v2032
    %2069 = vmatprep.subr.mxu0 0.0
    %2070 = vmatpush1.msra.mxu0 %v2031
    %2071 = vmatprep.subr.mxu0 0.0
    %2072 = vmatpush1.msra.mxu0 %v2030
    %2073 = vmatprep.subr.mxu0 0.0
    %2074 = vmatpush1.msra.mxu0 %v2029
    %2075 = vmatprep.subr.mxu0 0.0
    %2076 = vmatpush2.msra.mxu0 0.0
    %2077 = vmatprep.subr.mxu0 0.0
    %2078 = vmatpush2.msra.mxu0 0.0
    %2079 = vmatprep.subr.mxu0 0.0
    %2080 = vmatpush2.msra.mxu0 0.0
    %2081 = vmatprep.subr.mxu0 0.0
    %2082 = vmatpush2.msra.mxu0 0.0
    %2083 = vmatprep.subr.mxu0 0.0
    %2084 = vmatpush2.msra.mxu0 0.0
    %2085 = vmatprep.subr.mxu0 0.0
    %2086 = vmatpush2.msra.mxu0 0.0
    %2087 = vmatprep.subr.mxu0 0.0
    %2088 = vmatpush2.msra.mxu0 0.0
    %2089 = vmatprep.subr.mxu0 0.0
    %2090 = vmatpush2.msra.mxu0 0.0
    %2091 = vmatprep.subr.mxu0 0.0
    %2092 = vmatpush2.msra.mxu0 0.0
    %2093 = vmatprep.subr.mxu0 0.0
    %2094 = vmatpush2.msra.mxu0 0.0
    %2095 = vmatprep.subr.mxu0 0.0
    %2096 = vmatpush2.msra.mxu0 0.0
    %2097 = vmatprep.subr.mxu0 0.0
    %2098 = vmatpush2.msra.mxu0 0.0
    %2099 = vmatprep.subr.mxu0 0.0
    %2100 = vmatpush2.msra.mxu0 0.0
    %2101 = vmatprep.subr.mxu0 0.0
    %2102 = vmatpush2.msra.mxu0 0.0
    %2103 = vmatprep.subr.mxu0 0.0
    %2104 = vmatpush2.msra.mxu0 0.0
    %2105 = vmatprep.subr.mxu0 0.0
    %2106 = vmatpush2.msra.mxu0 0.0
    %2107 = vmatprep.mubr.f32.mxu0 0.0
    %2108 = vmatmul.mubr.f32.gmra.mxu0 %v2041
    %v2109 = vpop.f32.mrf.mxu0
    %v2110 = vadd.f32 %v2038, %v2109
    %v2111 = vpop.f32.mrf.mxu0
    %2112 = vdwg.mxu0
    %vm2113 = vcmask 39936
    %2114 = vst.msk [vmem:[#allocation12] sm:$0xff] %vm2113, %v2110
    // Predicated region
    $region54: #{tpu_custom_call.1} parent=1 // pred_check
      _
    $region55: #{tpu_custom_call.1} parent=1 // pred_check_branch
      %2116 = sbr.rel (0) target = $region57
    $region56: #{tpu_custom_call.1} parent=1 // pred_region
      %s2118 = ssub.s32 128, 128
      %2119 = vsyncadd [#allocation6], %s2118
      %s2121 = sshll.u32 [#allocation12], 4
      %s2122 = int_to_ptr.vmem [resolvable:$true] %s2121
      %2124 = dma.vmem_to_hbm [thread:$0]  %s2122, 128, %s9, [#allocation6]
    $region57: #{tpu_custom_call.1} parent=1 // pred_fallthru
      _
    // Predicated region
    $region58: #{tpu_custom_call.1} parent=1 // pred_check
      _
    $region59: #{tpu_custom_call.1} parent=1 // pred_check_branch
      %2126 = sbr.rel (0) target = $region61
    $region60: #{tpu_custom_call.1} parent=1 // pred_region
      %2127 = dma.done [#allocation6], 128
    $region61: #{tpu_custom_call.1} parent=1 // pred_fallthru
      _
    %2128 = vsyncpa [#allocation5], 1
    %2129 = vsyncpa [#allocation8], 1
    %2130 = vsyncpa [#allocation11], 1
    %2131 = vsyncpa [#allocation6], 1

</llo_original>
